<compile_context>
chip_gen: v6e
topology: v6e:2x2x1
jax: 0.10.0
libtpu: 0.0.40
codegen_flags: <defaults>
</compile_context>

<pallas_src>
import functools

import jax
import jax.numpy as jnp
from jax import lax
from jax.experimental import pallas as pl
from jax.experimental.pallas import tpu as pltpu

# Tap order: t = (dy+1)*3 + (dx+1)  (matches w[:, :, ky, kx], ky=t//3, kx=t%3)
_TAPS = tuple((dy, dx) for dy in (-1, 0, 1) for dx in (-1, 0, 1))


# ---------------------------------------------------------------------------
# Fused QualityEncoder kernel: one grid step == one batch element.
# ---------------------------------------------------------------------------
def _qem_fused_kernel(iou_sref, x_ref, logit_ref, mask_ref,
                      wf_ref, bf_ref, wp_ref, bp_ref, wpq_ref, bpq_ref,
                      wic_ref, bic_ref, wiq_ref, biq_ref,
                      wof_ref, woq_ref, bo_ref,
                      o_ref, *, H, W):
    b = pl.program_id(0)
    S = H * W
    OUT = o_ref.shape[1]

    x = x_ref[0]               # (C,  S)  features[-1], channel-major
    logits = logit_ref[0]      # (NP, S)  parsing logits, channel-major
    masks = mask_ref[...]      # (8,  S)  hoisted boundary masks (off-center taps)
    iou = iou_sref[b]          # scalar   iou prediction (SMEM)

    # ---- feat_conv: 3x3 / pad-1 conv C -> Q as ONE K=9*C MXU dot -----------
    # Per off-center tap: lane-roll the (C,S) slab by the spatial offset (XLU)
    # and zero the wrapped / out-of-image columns (VPU); stack all 9 taps
    # along the contraction axis and hit the MXU once.
    slabs = []
    for t, (dy, dx) in enumerate(_TAPS):
        if dy == 0 and dx == 0:
            slabs.append(x)
        else:
            row = t if t < 4 else t - 1
            d = dy * W + dx
            slabs.append(pltpu.roll(x, (-d) % S, axis=1) * masks[row:row + 1])
    stacked = jnp.concatenate(slabs, axis=0).astype(jnp.bfloat16)      # (9C, S)
    featq = jnp.maximum(
        jnp.dot(wf_ref[...], stacked, preferred_element_type=jnp.float32)
        + bf_ref[...], 0.0)                                            # (Q, S)
    featq_bf = featq.astype(jnp.bfloat16)

    # ---- quality attention (tiny dots kept f32: softmax-logit sensitive) ---
    prob_query = jnp.maximum(
        jnp.dot(wp_ref[...], logits, preferred_element_type=jnp.float32)
        + bp_ref[...], 0.0)                                            # (Q, S)
    # torch.matmul(prob_query, feat_key): contract last dims (no featq.T).
    pq = lax.dot_general(prob_query, featq,
                         dimension_numbers=(((1,), (1,)), ((), ())),
                         preferred_element_type=jnp.float32)           # (Q, Q)
    pq = jnp.maximum(
        jnp.dot(wpq_ref[...], pq, preferred_element_type=jnp.float32)
        + bpq_ref[...], 0.0)
    m = jnp.max(pq, axis=-1, keepdims=True)
    e = jnp.exp(pq - m)
    sm = e * pl.reciprocal(jnp.sum(e, axis=-1, keepdims=True), approx=True)

    # iou_conv (1x1, 1 -> Q) on the scalar iou (+ReLU)  -> iou_query (1, Q)
    iou_query = jnp.maximum(wic_ref[...] * iou + bic_ref[...], 0.0)
    # torch.matmul(feat_key, iou_query), kept channel-major -> (1, S)
    iou_pre = jnp.dot(iou_query, featq, preferred_element_type=jnp.float32)
    # iou_quality (1x1, 1 -> Q) (+ReLU)                        -> (Q, S)
    iou_qual = jnp.maximum(wiq_ref[...] * iou_pre + biq_ref[...], 0.0)
    # quality_feat = softmax(prob_quality) @ iou_quality       -> (Q, S)
    quality = jnp.dot(sm.astype(jnp.bfloat16), iou_qual.astype(jnp.bfloat16),
                      preferred_element_type=jnp.float32)

    # ---- conv_out: 3x3 / pad-1 conv 2Q -> OUT, output-roll form, no concat -
    # W_all @ [featq; quality] == W_feat_half @ featq + W_qual_half @ quality.
    y = (jnp.dot(wof_ref[...], featq_bf, preferred_element_type=jnp.float32)
         + jnp.dot(woq_ref[...], quality.astype(jnp.bfloat16),
                   preferred_element_type=jnp.float32))               # (9*OUT, S)
    acc = y[4 * OUT:5 * OUT]                                          # center tap
    for t, (dy, dx) in enumerate(_TAPS):
        if dy == 0 and dx == 0:
            continue
        row = t if t < 4 else t - 1
        d = dy * W + dx
        acc = acc + masks[row:row + 1] * pltpu.roll(
            y[t * OUT:(t + 1) * OUT], (-d) % S, axis=1)
    o_ref[0] = jnp.maximum(acc + bo_ref[...], 0.0)                    # (OUT, S)


# ---------------------------------------------------------------------------
# Wrapper: free NCHW <-> (C, S) reshapes + one-time weight/mask prep; one
# pallas_call for the whole forward pass.
# ---------------------------------------------------------------------------
def qem_quality_encoder(features, parsing_logits, iou_pred, params):
    feat = features[-1]                      # (B, C, H, W) NCHW, like PyTorch
    B, C, H, W = feat.shape
    S = H * W
    NP = parsing_logits.shape[1]
    Q = params["wp"].shape[0]
    OUT = params["w_out"].shape[1]

    x_cs = feat.reshape(B, C, S)                       # free reshape of NCHW
    logits_cs = parsing_logits.reshape(B, NP, S)       # free reshape of NCHW
    iou_flat = iou_pred.reshape(B).astype(jnp.float32)

    # Grid-invariant boundary masks for the 8 off-center conv taps (hoisted
    # out of the kernel; center tap needs no mask).
    pos = jnp.arange(S, dtype=jnp.int32)[None, :]
    ys, xs = pos // W, pos % W
    masks = jnp.concatenate(
        [((ys + dy >= 0) & (ys + dy < H) & (xs + dx >= 0)
          & (xs + dx < W)).astype(jnp.float32)
         for (dy, dx) in _TAPS if not (dy == 0 and dx == 0)],
        axis=0)                                                   # (8, S)

    # Consolidated, lane-dense, bf16 MXU weight operands (trace-time prep).
    wf_all = jnp.transpose(params["w_feat"], (1, 0, 2)).reshape(
        Q, 9 * C).astype(jnp.bfloat16)                            # (Q, 9C)
    wo = params["w_out"]                                          # (9, OUT, 2Q)
    wo_feat = wo[:, :, :Q].reshape(9 * OUT, Q).astype(jnp.bfloat16)
    wo_qual = wo[:, :, Q:].reshape(9 * OUT, Q).astype(jnp.bfloat16)

    def batch_spec(c):
        return pl.BlockSpec((1, c, S), lambda b, iou: (b, 0, 0))

    def const_spec(shape):
        return pl.BlockSpec(shape, lambda b, iou: (0,) * len(shape))

    grid_spec = pltpu.PrefetchScalarGridSpec(
        num_scalar_prefetch=1,                         # iou_pred -> SMEM
        grid=(B,),
        in_specs=[
            batch_spec(C),                  # features[-1]   (B, C, S)
            batch_spec(NP),                 # parsing logits (B, NP, S)
            const_spec((8, S)),             # boundary masks
            const_spec((Q, 9 * C)),         # feat_conv weight, tap-major along K
            const_spec((Q, 1)),             # feat_conv bias
            const_spec((Q, NP)),            # prob_conv weight
            const_spec((Q, 1)),             # prob_conv bias
            const_spec((Q, Q)),             # prob_quality weight
            const_spec((Q, 1)),             # prob_quality bias
            const_spec((1, Q)),             # iou_conv weight (row)
            const_spec((1, Q)),             # iou_conv bias (row)
            const_spec((Q, 1)),             # iou_quality weight (col)
            const_spec((Q, 1)),             # iou_quality bias (col)
            const_spec((9 * OUT, Q)),       # conv_out weight, featq half
            const_spec((9 * OUT, Q)),       # conv_out weight, quality half
            const_spec((OUT, 1)),           # conv_out bias
        ],
        out_specs=pl.BlockSpec((1, OUT, S), lambda b, iou: (b, 0, 0)),
    )

    flops = 2 * B * S * (Q * 9 * C + Q * NP + Q * Q + Q + Q * Q
                         + 9 * OUT * 2 * Q) + 2 * B * Q * Q * Q
    bytes_accessed = (4 * B * (C + NP + OUT) * S + 4 * B + 4 * 8 * S
                      + 2 * (Q * 9 * C + 2 * 9 * OUT * Q)
                      + 4 * (4 * Q + 2 * Q + OUT + Q * NP + Q * Q))
    cost = pl.CostEstimate(flops=flops, transcendentals=B * Q * Q,
                           bytes_accessed=bytes_accessed)

    out_cs = pl.pallas_call(
        functools.partial(_qem_fused_kernel, H=H, W=W),
        out_shape=jax.ShapeDtypeStruct((B, OUT, S), jnp.float32),
        grid_spec=grid_spec,
        compiler_params=pltpu.CompilerParams(
            dimension_semantics=("parallel",)),   # B shards across v7x's 2 TCs
        cost_estimate=cost,
    )(iou_flat, x_cs, logits_cs, masks,
      wf_all, params["b_feat"], params["wp"], params["bp"],
      params["wpq"], params["bpq"], params["wic"], params["bic"],
      params["wiq"], params["biq"], wo_feat, wo_qual, params["b_out"])

    return [out_cs.reshape(B, OUT, H, W)]              # NCHW, like PyTorch


# ---------------------------------------------------------------------------
# Pure-JAX reference (correctness check only), full f32 precision.
# ---------------------------------------------------------------------------
def reference_forward(feat, parsing_logits, iou_pred, params):
    HI = jax.lax.Precision.HIGHEST
    B, C, H, W = feat.shape
    Q = params["wp"].shape[0]
    NP = parsing_logits.shape[1]

    def conv3x3_ref(x, w_taps, b_col):
        cout, cin = w_taps.shape[1], w_taps.shape[2]
        w = jnp.transpose(w_taps.reshape(3, 3, cout, cin), (2, 3, 0, 1))  # OIHW
        y = lax.conv_general_dilated(
            x, w, window_strides=(1, 1), padding=((1, 1), (1, 1)),
            dimension_numbers=("NCHW", "OIHW", "NCHW"), precision=HI)
        return jnp.maximum(y + b_col.reshape(1, cout, 1, 1), 0.0)

    featq = conv3x3_ref(feat, params["w_feat"], params["b_feat"])    # (B,Q,H,W)
    fk = featq.reshape(B, Q, H * W).transpose(0, 2, 1)               # (B,S,Q)
    logits_cs = parsing_logits.reshape(B, NP, H * W)

    prob_query = jnp.maximum(
        jnp.einsum("qp,bps->bqs", params["wp"], logits_cs, precision=HI)
        + params["bp"][None], 0.0)
    pq = jnp.einsum("bqs,bsk->bqk", prob_query, fk, precision=HI)
    pq = jnp.maximum(
        jnp.einsum("ik,bkj->bij", params["wpq"], pq, precision=HI)
        + params["bpq"][None], 0.0)
    sm = jax.nn.softmax(pq, axis=-1)

    iou_q = jnp.maximum(params["wic"][0][None] * iou_pred[:, None]
                        + params["bic"][0][None], 0.0)               # (B,Q)
    iou_pre = jnp.einsum("bsq,bq->bs", fk, iou_q, precision=HI)      # (B,S)
    iou_qual = jnp.maximum(
        params["wiq"][:, 0][None, :, None] * iou_pre[:, None, :]
        + params["biq"][:, 0][None, :, None], 0.0)                   # (B,Q,S)
    quality = jnp.einsum("bij,bjs->bis", sm, iou_qual, precision=HI)
    quality = quality.reshape(B, Q, H, W)

    cat = jnp.concatenate([featq, quality], axis=1)                  # (B,2Q,H,W)
    return conv3x3_ref(cat, params["w_out"], params["b_out"])        # (B,OUT,H,W)


if __name__ == "__main__":
    B, C, H, W = 2, 8, 16, 16       # features[-1]: (B, C, H, W) NCHW
    NP, Q, OUT = 8, 32, 32          # NUM_PARSING, QEM_DIM, OUTPUT_DIM

    key = jax.random.PRNGKey(0)
    ks = jax.random.split(key, 16)

    def rnd(k, shape, scale):
        return scale * jax.random.normal(k, shape, jnp.float32)

    params = {
        # feat_conv (3x3, C -> Q), tap-major (t=ky*3+kx, Cout, Cin)
        "w_feat": rnd(ks[0], (9, Q, C), 0.1),
        "b_feat": rnd(ks[1], (Q, 1), 0.05),
        # prob_conv (1x1, NP -> Q)
        "wp": rnd(ks[2], (Q, NP), 0.05),
        "bp": rnd(ks[3], (Q, 1), 0.05),
        # prob_quality (1x1, Q -> Q)
        "wpq": rnd(ks[4], (Q, Q), 0.02),
        "bpq": rnd(ks[5], (Q, 1), 0.05),
        # iou_conv (1x1, 1 -> Q), stored as a row vector
        "wic": rnd(ks[6], (1, Q), 0.1),
        "bic": rnd(ks[7], (1, Q), 0.05),
        # iou_quality (1x1, 1 -> Q), stored as a column vector
        "wiq": rnd(ks[8], (Q, 1), 0.1),
        "biq": rnd(ks[9], (Q, 1), 0.05),
        # conv_out (3x3, 2Q -> OUT), tap-major
        "w_out": rnd(ks[10], (9, OUT, 2 * Q), 0.05),
        "b_out": rnd(ks[11], (OUT, 1), 0.05),
    }

    feat = jax.random.normal(ks[12], (B, C, H, W), jnp.float32)
    parsing_logits = jax.random.normal(ks[13], (B, NP, H, W), jnp.float32)
    iou_pred = jax.nn.sigmoid(jax.random.normal(ks[14], (B,), jnp.float32))

    fwd = jax.jit(lambda f, plog, iou: qem_quality_encoder([f], plog, iou, params))
    out = jax.block_until_ready(fwd(feat, parsing_logits, iou_pred)[0])

    ref = reference_forward(feat, parsing_logits, iou_pred, params)
    err = float(jnp.max(jnp.abs(out - ref)))
    # Tolerance ~2e-2 relative: the conv / quality dots intentionally run with
    # bf16 operands + f32 accumulation (per perf review) vs the HIGHEST-
    # precision f32 XLA reference; softmax-logit dots stay f32 in the kernel.
    tol = 2e-2 * (1.0 + float(jnp.max(jnp.abs(ref))))
    assert bool(jnp.all(jnp.isfinite(out))), "non-finite kernel output"
    assert err < tol, f"kernel/reference mismatch: max abs err {err} (tol {tol})"
    print("KERNEL_OK")
</pallas_src>

<mosaic_0001>
module attributes {stable_mosaic.version = 11 : i64} {
  func.func @_qem_fused_kernel(%arg0: i32, %arg1: memref<2xf32, #tpu.memory_space<smem>>, %arg2: memref<1x8x256xf32, #tpu.memory_space<vmem>>, %arg3: memref<1x8x256xf32, #tpu.memory_space<vmem>>, %arg4: memref<8x256xf32, #tpu.memory_space<vmem>>, %arg5: memref<32x72xbf16, #tpu.memory_space<vmem>>, %arg6: memref<32x1xf32, #tpu.memory_space<vmem>>, %arg7: memref<32x8xf32, #tpu.memory_space<vmem>>, %arg8: memref<32x1xf32, #tpu.memory_space<vmem>>, %arg9: memref<32x32xf32, #tpu.memory_space<vmem>>, %arg10: memref<32x1xf32, #tpu.memory_space<vmem>>, %arg11: memref<1x32xf32, #tpu.memory_space<vmem>>, %arg12: memref<1x32xf32, #tpu.memory_space<vmem>>, %arg13: memref<32x1xf32, #tpu.memory_space<vmem>>, %arg14: memref<32x1xf32, #tpu.memory_space<vmem>>, %arg15: memref<288x32xbf16, #tpu.memory_space<vmem>>, %arg16: memref<288x32xbf16, #tpu.memory_space<vmem>>, %arg17: memref<32x1xf32, #tpu.memory_space<vmem>>, %arg18: memref<1x32x256xf32, #tpu.memory_space<vmem>>) attributes {dimension_semantics = [#tpu.dimension_semantics<parallel>], iteration_bounds = array<i64: 2>, scalar_prefetch = 1 : i64, scratch_operands = 0 : i64, tpu.core_type = #tpu.core_type<tc>, window_params = [{transform_indices = @transform_0, window_bounds = array<i64: 1, 8, 256>}, {transform_indices = @transform_1, window_bounds = array<i64: 1, 8, 256>}, {pipeline_mode = #tpu.pipeline_mode<synchronous>, transform_indices = @transform_2, window_bounds = array<i64: 8, 256>}, {pipeline_mode = #tpu.pipeline_mode<synchronous>, transform_indices = @transform_3, window_bounds = array<i64: 32, 72>}, {pipeline_mode = #tpu.pipeline_mode<synchronous>, transform_indices = @transform_4, window_bounds = array<i64: 32, 1>}, {pipeline_mode = #tpu.pipeline_mode<synchronous>, transform_indices = @transform_5, window_bounds = array<i64: 32, 8>}, {pipeline_mode = #tpu.pipeline_mode<synchronous>, transform_indices = @transform_6, window_bounds = array<i64: 32, 1>}, {pipeline_mode = #tpu.pipeline_mode<synchronous>, transform_indices = @transform_7, window_bounds = array<i64: 32, 32>}, {pipeline_mode = #tpu.pipeline_mode<synchronous>, transform_indices = @transform_8, window_bounds = array<i64: 32, 1>}, {pipeline_mode = #tpu.pipeline_mode<synchronous>, transform_indices = @transform_9, window_bounds = array<i64: 1, 32>}, {pipeline_mode = #tpu.pipeline_mode<synchronous>, transform_indices = @transform_10, window_bounds = array<i64: 1, 32>}, {pipeline_mode = #tpu.pipeline_mode<synchronous>, transform_indices = @transform_11, window_bounds = array<i64: 32, 1>}, {pipeline_mode = #tpu.pipeline_mode<synchronous>, transform_indices = @transform_12, window_bounds = array<i64: 32, 1>}, {pipeline_mode = #tpu.pipeline_mode<synchronous>, transform_indices = @transform_13, window_bounds = array<i64: 288, 32>}, {pipeline_mode = #tpu.pipeline_mode<synchronous>, transform_indices = @transform_14, window_bounds = array<i64: 288, 32>}, {pipeline_mode = #tpu.pipeline_mode<synchronous>, transform_indices = @transform_15, window_bounds = array<i64: 32, 1>}, {transform_indices = @transform_16, window_bounds = array<i64: 1, 32, 256>}]} {
    %c0 = arith.constant 0 : index
    %c0_0 = arith.constant 0 : index
    %c0_1 = arith.constant 0 : index
    %0 = vector.load %arg2[%c0, %c0_0, %c0_1] : memref<1x8x256xf32, #tpu.memory_space<vmem>>, vector<1x8x256xf32>
    %1 = vector.shape_cast %0 : vector<1x8x256xf32> to vector<8x256xf32>
    %c0_2 = arith.constant 0 : index
    %c0_3 = arith.constant 0 : index
    %c0_4 = arith.constant 0 : index
    %2 = vector.load %arg3[%c0_2, %c0_3, %c0_4] : memref<1x8x256xf32, #tpu.memory_space<vmem>>, vector<1x8x256xf32>
    %3 = vector.shape_cast %2 : vector<1x8x256xf32> to vector<8x256xf32>
    %c0_5 = arith.constant 0 : index
    %c0_6 = arith.constant 0 : index
    %4 = vector.load %arg4[%c0_5, %c0_6] : memref<8x256xf32, #tpu.memory_space<vmem>>, vector<8x256xf32>
    %5 = arith.index_cast %arg0 : i32 to index
    %6 = memref.load %arg1[%5] : memref<2xf32, #tpu.memory_space<smem>>
    %c17_i32 = arith.constant 17 : i32
    %7 = tpu.dynamic_rotate %1 by %c17_i32 dim 1 : vector<8x256xf32>, i32 -> vector<8x256xf32>
    %8 = vector.extract_strided_slice %4 {offsets = [0, 0], sizes = [1, 256], strides = [1, 1]} : vector<8x256xf32> to vector<1x256xf32>
    %9 = vector.broadcast %8 : vector<1x256xf32> to vector<8x256xf32>
    %10 = arith.mulf %7, %9 : vector<8x256xf32>
    %c16_i32 = arith.constant 16 : i32
    %11 = tpu.dynamic_rotate %1 by %c16_i32 dim 1 : vector<8x256xf32>, i32 -> vector<8x256xf32>
    %12 = vector.extract_strided_slice %4 {offsets = [1, 0], sizes = [1, 256], strides = [1, 1]} : vector<8x256xf32> to vector<1x256xf32>
    %13 = vector.broadcast %12 : vector<1x256xf32> to vector<8x256xf32>
    %14 = arith.mulf %11, %13 : vector<8x256xf32>
    %c15_i32 = arith.constant 15 : i32
    %15 = tpu.dynamic_rotate %1 by %c15_i32 dim 1 : vector<8x256xf32>, i32 -> vector<8x256xf32>
    %16 = vector.extract_strided_slice %4 {offsets = [2, 0], sizes = [1, 256], strides = [1, 1]} : vector<8x256xf32> to vector<1x256xf32>
    %17 = vector.broadcast %16 : vector<1x256xf32> to vector<8x256xf32>
    %18 = arith.mulf %15, %17 : vector<8x256xf32>
    %c1_i32 = arith.constant 1 : i32
    %19 = tpu.dynamic_rotate %1 by %c1_i32 dim 1 : vector<8x256xf32>, i32 -> vector<8x256xf32>
    %20 = vector.extract_strided_slice %4 {offsets = [3, 0], sizes = [1, 256], strides = [1, 1]} : vector<8x256xf32> to vector<1x256xf32>
    %21 = vector.broadcast %20 : vector<1x256xf32> to vector<8x256xf32>
    %22 = arith.mulf %19, %21 : vector<8x256xf32>
    %c255_i32 = arith.constant 255 : i32
    %23 = tpu.dynamic_rotate %1 by %c255_i32 dim 1 : vector<8x256xf32>, i32 -> vector<8x256xf32>
    %24 = vector.extract_strided_slice %4 {offsets = [4, 0], sizes = [1, 256], strides = [1, 1]} : vector<8x256xf32> to vector<1x256xf32>
    %25 = vector.broadcast %24 : vector<1x256xf32> to vector<8x256xf32>
    %26 = arith.mulf %23, %25 : vector<8x256xf32>
    %c241_i32 = arith.constant 241 : i32
    %27 = tpu.dynamic_rotate %1 by %c241_i32 dim 1 : vector<8x256xf32>, i32 -> vector<8x256xf32>
    %28 = vector.extract_strided_slice %4 {offsets = [5, 0], sizes = [1, 256], strides = [1, 1]} : vector<8x256xf32> to vector<1x256xf32>
    %29 = vector.broadcast %28 : vector<1x256xf32> to vector<8x256xf32>
    %30 = arith.mulf %27, %29 : vector<8x256xf32>
    %c240_i32 = arith.constant 240 : i32
    %31 = tpu.dynamic_rotate %1 by %c240_i32 dim 1 : vector<8x256xf32>, i32 -> vector<8x256xf32>
    %32 = vector.extract_strided_slice %4 {offsets = [6, 0], sizes = [1, 256], strides = [1, 1]} : vector<8x256xf32> to vector<1x256xf32>
    %33 = vector.broadcast %32 : vector<1x256xf32> to vector<8x256xf32>
    %34 = arith.mulf %31, %33 : vector<8x256xf32>
    %c239_i32 = arith.constant 239 : i32
    %35 = tpu.dynamic_rotate %1 by %c239_i32 dim 1 : vector<8x256xf32>, i32 -> vector<8x256xf32>
    %36 = vector.extract_strided_slice %4 {offsets = [7, 0], sizes = [1, 256], strides = [1, 1]} : vector<8x256xf32> to vector<1x256xf32>
    %37 = vector.broadcast %36 : vector<1x256xf32> to vector<8x256xf32>
    %38 = arith.mulf %35, %37 : vector<8x256xf32>
    %39 = tpu.concatenate %10, %14, %18, %22, %1, %26, %30, %34, %38 in 0 : vector<8x256xf32>, vector<8x256xf32>, vector<8x256xf32>, vector<8x256xf32>, vector<8x256xf32>, vector<8x256xf32>, vector<8x256xf32>, vector<8x256xf32>, vector<8x256xf32> -> vector<72x256xf32>
    %40 = arith.truncf %39 : vector<72x256xf32> to vector<72x256xbf16>
    %c0_7 = arith.constant 0 : index
    %c0_8 = arith.constant 0 : index
    %41 = vector.load %arg5[%c0_7, %c0_8] : memref<32x72xbf16, #tpu.memory_space<vmem>>, vector<32x72xbf16>
    %cst = arith.constant dense<0.000000e+00> : vector<32x256xf32>
    %42 = tpu.matmul %41, %40, %cst {dimension_numbers = #tpu.dot_dimension_numbers<[1], [0], [0], [1], [0, 0, 1, 1], [], []>} : vector<32x72xbf16>, vector<72x256xbf16>, vector<32x256xf32> -> vector<32x256xf32>
    %c0_9 = arith.constant 0 : index
    %c0_10 = arith.constant 0 : index
    %43 = vector.load %arg6[%c0_9, %c0_10] : memref<32x1xf32, #tpu.memory_space<vmem>>, vector<32x1xf32>
    %44 = vector.broadcast %43 : vector<32x1xf32> to vector<32x256xf32>
    %45 = arith.addf %42, %44 : vector<32x256xf32>
    %cst_11 = arith.constant 0.000000e+00 : f32
    %46 = vector.broadcast %cst_11 : f32 to vector<32x256xf32>
    %47 = arith.maximumf %45, %46 : vector<32x256xf32>
    %48 = arith.truncf %47 : vector<32x256xf32> to vector<32x256xbf16>
    %c0_12 = arith.constant 0 : index
    %c0_13 = arith.constant 0 : index
    %49 = vector.load %arg7[%c0_12, %c0_13] : memref<32x8xf32, #tpu.memory_space<vmem>>, vector<32x8xf32>
    %cst_14 = arith.constant dense<0.000000e+00> : vector<32x256xf32>
    %50 = tpu.matmul %49, %3, %cst_14 {dimension_numbers = #tpu.dot_dimension_numbers<[1], [0], [0], [1], [0, 0, 1, 1], [], []>} : vector<32x8xf32>, vector<8x256xf32>, vector<32x256xf32> -> vector<32x256xf32>
    %c0_15 = arith.constant 0 : index
    %c0_16 = arith.constant 0 : index
    %51 = vector.load %arg8[%c0_15, %c0_16] : memref<32x1xf32, #tpu.memory_space<vmem>>, vector<32x1xf32>
    %52 = vector.broadcast %51 : vector<32x1xf32> to vector<32x256xf32>
    %53 = arith.addf %50, %52 : vector<32x256xf32>
    %cst_17 = arith.constant 0.000000e+00 : f32
    %54 = vector.broadcast %cst_17 : f32 to vector<32x256xf32>
    %55 = arith.maximumf %53, %54 : vector<32x256xf32>
    %cst_18 = arith.constant dense<0.000000e+00> : vector<32x32xf32>
    %56 = tpu.matmul %55, %47, %cst_18 {dimension_numbers = #tpu.dot_dimension_numbers<[1], [1], [0], [0], [0, 0, 1, 0], [], []>} : vector<32x256xf32>, vector<32x256xf32>, vector<32x32xf32> -> vector<32x32xf32>
    %c0_19 = arith.constant 0 : index
    %c0_20 = arith.constant 0 : index
    %57 = vector.load %arg9[%c0_19, %c0_20] : memref<32x32xf32, #tpu.memory_space<vmem>>, vector<32x32xf32>
    %cst_21 = arith.constant dense<0.000000e+00> : vector<32x32xf32>
    %58 = tpu.matmul %57, %56, %cst_21 {dimension_numbers = #tpu.dot_dimension_numbers<[1], [0], [0], [1], [0, 0, 1, 1], [], []>} : vector<32x32xf32>, vector<32x32xf32>, vector<32x32xf32> -> vector<32x32xf32>
    %c0_22 = arith.constant 0 : index
    %c0_23 = arith.constant 0 : index
    %59 = vector.load %arg10[%c0_22, %c0_23] : memref<32x1xf32, #tpu.memory_space<vmem>>, vector<32x1xf32>
    %60 = vector.broadcast %59 : vector<32x1xf32> to vector<32x32xf32>
    %61 = arith.addf %58, %60 : vector<32x32xf32>
    %cst_24 = arith.constant 0.000000e+00 : f32
    %62 = vector.broadcast %cst_24 : f32 to vector<32x32xf32>
    %63 = arith.maximumf %61, %62 : vector<32x32xf32>
    %cst_25 = arith.constant dense<0xFF800000> : vector<32xf32>
    %64 = vector.multi_reduction <maximumf>, %63, %cst_25 [1] : vector<32x32xf32> to vector<32xf32>
    %65 = vector.shape_cast %64 : vector<32xf32> to vector<32x1xf32>
    %66 = vector.broadcast %65 : vector<32x1xf32> to vector<32x32xf32>
    %67 = arith.subf %63, %66 : vector<32x32xf32>
    %68 = math.exp %67 : vector<32x32xf32>
    %cst_26 = arith.constant dense<0.000000e+00> : vector<32xf32>
    %69 = vector.multi_reduction <add>, %68, %cst_26 [1] : vector<32x32xf32> to vector<32xf32>
    %70 = vector.shape_cast %69 : vector<32xf32> to vector<32x1xf32>
    %71 = tpu.reciprocal %70 {approx = true} : vector<32x1xf32> -> vector<32x1xf32>
    %72 = vector.broadcast %71 : vector<32x1xf32> to vector<32x32xf32>
    %73 = arith.mulf %68, %72 : vector<32x32xf32>
    %c0_27 = arith.constant 0 : index
    %c0_28 = arith.constant 0 : index
    %74 = vector.load %arg11[%c0_27, %c0_28] : memref<1x32xf32, #tpu.memory_space<vmem>>, vector<1x32xf32>
    %75 = vector.broadcast %6 : f32 to vector<1x32xf32>
    %76 = arith.mulf %74, %75 : vector<1x32xf32>
    %c0_29 = arith.constant 0 : index
    %c0_30 = arith.constant 0 : index
    %77 = vector.load %arg12[%c0_29, %c0_30] : memref<1x32xf32, #tpu.memory_space<vmem>>, vector<1x32xf32>
    %78 = arith.addf %76, %77 : vector<1x32xf32>
    %cst_31 = arith.constant 0.000000e+00 : f32
    %79 = vector.broadcast %cst_31 : f32 to vector<1x32xf32>
    %80 = arith.maximumf %78, %79 : vector<1x32xf32>
    %cst_32 = arith.constant dense<0.000000e+00> : vector<1x256xf32>
    %81 = tpu.matmul %80, %47, %cst_32 {dimension_numbers = #tpu.dot_dimension_numbers<[1], [0], [0], [1], [0, 0, 1, 1], [], []>} : vector<1x32xf32>, vector<32x256xf32>, vector<1x256xf32> -> vector<1x256xf32>
    %c0_33 = arith.constant 0 : index
    %c0_34 = arith.constant 0 : index
    %82 = vector.load %arg13[%c0_33, %c0_34] : memref<32x1xf32, #tpu.memory_space<vmem>>, vector<32x1xf32>
    %83 = vector.broadcast %82 : vector<32x1xf32> to vector<32x256xf32>
    %84 = vector.broadcast %81 : vector<1x256xf32> to vector<32x256xf32>
    %85 = arith.mulf %83, %84 : vector<32x256xf32>
    %c0_35 = arith.constant 0 : index
    %c0_36 = arith.constant 0 : index
    %86 = vector.load %arg14[%c0_35, %c0_36] : memref<32x1xf32, #tpu.memory_space<vmem>>, vector<32x1xf32>
    %87 = vector.broadcast %86 : vector<32x1xf32> to vector<32x256xf32>
    %88 = arith.addf %85, %87 : vector<32x256xf32>
    %cst_37 = arith.constant 0.000000e+00 : f32
    %89 = vector.broadcast %cst_37 : f32 to vector<32x256xf32>
    %90 = arith.maximumf %88, %89 : vector<32x256xf32>
    %91 = arith.truncf %73 : vector<32x32xf32> to vector<32x32xbf16>
    %92 = arith.truncf %90 : vector<32x256xf32> to vector<32x256xbf16>
    %cst_38 = arith.constant dense<0.000000e+00> : vector<32x256xf32>
    %93 = tpu.matmul %91, %92, %cst_38 {dimension_numbers = #tpu.dot_dimension_numbers<[1], [0], [0], [1], [0, 0, 1, 1], [], []>} : vector<32x32xbf16>, vector<32x256xbf16>, vector<32x256xf32> -> vector<32x256xf32>
    %c0_39 = arith.constant 0 : index
    %c0_40 = arith.constant 0 : index
    %94 = vector.load %arg15[%c0_39, %c0_40] : memref<288x32xbf16, #tpu.memory_space<vmem>>, vector<288x32xbf16>
    %cst_41 = arith.constant dense<0.000000e+00> : vector<288x256xf32>
    %95 = tpu.matmul %94, %48, %cst_41 {dimension_numbers = #tpu.dot_dimension_numbers<[1], [0], [0], [1], [0, 0, 1, 1], [], []>} : vector<288x32xbf16>, vector<32x256xbf16>, vector<288x256xf32> -> vector<288x256xf32>
    %c0_42 = arith.constant 0 : index
    %c0_43 = arith.constant 0 : index
    %96 = vector.load %arg16[%c0_42, %c0_43] : memref<288x32xbf16, #tpu.memory_space<vmem>>, vector<288x32xbf16>
    %97 = arith.truncf %93 : vector<32x256xf32> to vector<32x256xbf16>
    %cst_44 = arith.constant dense<0.000000e+00> : vector<288x256xf32>
    %98 = tpu.matmul %96, %97, %cst_44 {dimension_numbers = #tpu.dot_dimension_numbers<[1], [0], [0], [1], [0, 0, 1, 1], [], []>} : vector<288x32xbf16>, vector<32x256xbf16>, vector<288x256xf32> -> vector<288x256xf32>
    %99 = arith.addf %95, %98 : vector<288x256xf32>
    %100 = vector.extract_strided_slice %99 {offsets = [128, 0], sizes = [32, 256], strides = [1, 1]} : vector<288x256xf32> to vector<32x256xf32>
    %101 = vector.extract_strided_slice %4 {offsets = [0, 0], sizes = [1, 256], strides = [1, 1]} : vector<8x256xf32> to vector<1x256xf32>
    %102 = vector.extract_strided_slice %99 {offsets = [0, 0], sizes = [32, 256], strides = [1, 1]} : vector<288x256xf32> to vector<32x256xf32>
    %c17_i32_45 = arith.constant 17 : i32
    %103 = tpu.dynamic_rotate %102 by %c17_i32_45 dim 1 : vector<32x256xf32>, i32 -> vector<32x256xf32>
    %104 = vector.broadcast %101 : vector<1x256xf32> to vector<32x256xf32>
    %105 = arith.mulf %104, %103 : vector<32x256xf32>
    %106 = arith.addf %100, %105 : vector<32x256xf32>
    %107 = vector.extract_strided_slice %4 {offsets = [1, 0], sizes = [1, 256], strides = [1, 1]} : vector<8x256xf32> to vector<1x256xf32>
    %108 = vector.extract_strided_slice %99 {offsets = [32, 0], sizes = [32, 256], strides = [1, 1]} : vector<288x256xf32> to vector<32x256xf32>
    %c16_i32_46 = arith.constant 16 : i32
    %109 = tpu.dynamic_rotate %108 by %c16_i32_46 dim 1 : vector<32x256xf32>, i32 -> vector<32x256xf32>
    %110 = vector.broadcast %107 : vector<1x256xf32> to vector<32x256xf32>
    %111 = arith.mulf %110, %109 : vector<32x256xf32>
    %112 = arith.addf %106, %111 : vector<32x256xf32>
    %113 = vector.extract_strided_slice %4 {offsets = [2, 0], sizes = [1, 256], strides = [1, 1]} : vector<8x256xf32> to vector<1x256xf32>
    %114 = vector.extract_strided_slice %99 {offsets = [64, 0], sizes = [32, 256], strides = [1, 1]} : vector<288x256xf32> to vector<32x256xf32>
    %c15_i32_47 = arith.constant 15 : i32
    %115 = tpu.dynamic_rotate %114 by %c15_i32_47 dim 1 : vector<32x256xf32>, i32 -> vector<32x256xf32>
    %116 = vector.broadcast %113 : vector<1x256xf32> to vector<32x256xf32>
    %117 = arith.mulf %116, %115 : vector<32x256xf32>
    %118 = arith.addf %112, %117 : vector<32x256xf32>
    %119 = vector.extract_strided_slice %4 {offsets = [3, 0], sizes = [1, 256], strides = [1, 1]} : vector<8x256xf32> to vector<1x256xf32>
    %120 = vector.extract_strided_slice %99 {offsets = [96, 0], sizes = [32, 256], strides = [1, 1]} : vector<288x256xf32> to vector<32x256xf32>
    %c1_i32_48 = arith.constant 1 : i32
    %121 = tpu.dynamic_rotate %120 by %c1_i32_48 dim 1 : vector<32x256xf32>, i32 -> vector<32x256xf32>
    %122 = vector.broadcast %119 : vector<1x256xf32> to vector<32x256xf32>
    %123 = arith.mulf %122, %121 : vector<32x256xf32>
    %124 = arith.addf %118, %123 : vector<32x256xf32>
    %125 = vector.extract_strided_slice %4 {offsets = [4, 0], sizes = [1, 256], strides = [1, 1]} : vector<8x256xf32> to vector<1x256xf32>
    %126 = vector.extract_strided_slice %99 {offsets = [160, 0], sizes = [32, 256], strides = [1, 1]} : vector<288x256xf32> to vector<32x256xf32>
    %c255_i32_49 = arith.constant 255 : i32
    %127 = tpu.dynamic_rotate %126 by %c255_i32_49 dim 1 : vector<32x256xf32>, i32 -> vector<32x256xf32>
    %128 = vector.broadcast %125 : vector<1x256xf32> to vector<32x256xf32>
    %129 = arith.mulf %128, %127 : vector<32x256xf32>
    %130 = arith.addf %124, %129 : vector<32x256xf32>
    %131 = vector.extract_strided_slice %4 {offsets = [5, 0], sizes = [1, 256], strides = [1, 1]} : vector<8x256xf32> to vector<1x256xf32>
    %132 = vector.extract_strided_slice %99 {offsets = [192, 0], sizes = [32, 256], strides = [1, 1]} : vector<288x256xf32> to vector<32x256xf32>
    %c241_i32_50 = arith.constant 241 : i32
    %133 = tpu.dynamic_rotate %132 by %c241_i32_50 dim 1 : vector<32x256xf32>, i32 -> vector<32x256xf32>
    %134 = vector.broadcast %131 : vector<1x256xf32> to vector<32x256xf32>
    %135 = arith.mulf %134, %133 : vector<32x256xf32>
    %136 = arith.addf %130, %135 : vector<32x256xf32>
    %137 = vector.extract_strided_slice %4 {offsets = [6, 0], sizes = [1, 256], strides = [1, 1]} : vector<8x256xf32> to vector<1x256xf32>
    %138 = vector.extract_strided_slice %99 {offsets = [224, 0], sizes = [32, 256], strides = [1, 1]} : vector<288x256xf32> to vector<32x256xf32>
    %c240_i32_51 = arith.constant 240 : i32
    %139 = tpu.dynamic_rotate %138 by %c240_i32_51 dim 1 : vector<32x256xf32>, i32 -> vector<32x256xf32>
    %140 = vector.broadcast %137 : vector<1x256xf32> to vector<32x256xf32>
    %141 = arith.mulf %140, %139 : vector<32x256xf32>
    %142 = arith.addf %136, %141 : vector<32x256xf32>
    %143 = vector.extract_strided_slice %4 {offsets = [7, 0], sizes = [1, 256], strides = [1, 1]} : vector<8x256xf32> to vector<1x256xf32>
    %144 = vector.extract_strided_slice %99 {offsets = [256, 0], sizes = [32, 256], strides = [1, 1]} : vector<288x256xf32> to vector<32x256xf32>
    %c239_i32_52 = arith.constant 239 : i32
    %145 = tpu.dynamic_rotate %144 by %c239_i32_52 dim 1 : vector<32x256xf32>, i32 -> vector<32x256xf32>
    %146 = vector.broadcast %143 : vector<1x256xf32> to vector<32x256xf32>
    %147 = arith.mulf %146, %145 : vector<32x256xf32>
    %148 = arith.addf %142, %147 : vector<32x256xf32>
    %c0_53 = arith.constant 0 : index
    %c0_54 = arith.constant 0 : index
    %149 = vector.load %arg17[%c0_53, %c0_54] : memref<32x1xf32, #tpu.memory_space<vmem>>, vector<32x1xf32>
    %150 = vector.broadcast %149 : vector<32x1xf32> to vector<32x256xf32>
    %151 = arith.addf %148, %150 : vector<32x256xf32>
    %cst_55 = arith.constant 0.000000e+00 : f32
    %152 = vector.broadcast %cst_55 : f32 to vector<32x256xf32>
    %153 = arith.maximumf %151, %152 : vector<32x256xf32>
    %c0_56 = arith.constant 0 : index
    %c0_57 = arith.constant 0 : index
    %c0_58 = arith.constant 0 : index
    %154 = vector.load %arg18[%c0_56, %c0_57, %c0_58] : memref<1x32x256xf32, #tpu.memory_space<vmem>>, vector<1x32x256xf32>
    %155 = vector.shape_cast %154 : vector<1x32x256xf32> to vector<32x256xf32>
    %156 = vector.shape_cast %153 : vector<32x256xf32> to vector<1x32x256xf32>
    tpu.vector_store %arg18[%c0_56, %c0_57, %c0_58], %156 {strides = array<i32>} : memref<1x32x256xf32, #tpu.memory_space<vmem>>, vector<1x32x256xf32>,
    return
  }
  func.func @transform_0(%arg0: i32, %arg1: memref<2xf32, #tpu.memory_space<smem>>) -> (i32, i32, i32) {
    %c0_i32 = arith.constant 0 : i32
    %c0_i32_0 = arith.constant 0 : i32
    %c0_i32_1 = arith.constant 0 : i32
    return %arg0, %c0_i32, %c0_i32_0 : i32, i32, i32
  }
  func.func @transform_1(%arg0: i32, %arg1: memref<2xf32, #tpu.memory_space<smem>>) -> (i32, i32, i32) {
    %c0_i32 = arith.constant 0 : i32
    %c0_i32_0 = arith.constant 0 : i32
    %c0_i32_1 = arith.constant 0 : i32
    return %arg0, %c0_i32, %c0_i32_0 : i32, i32, i32
  }
  func.func @transform_2(%arg0: i32, %arg1: memref<2xf32, #tpu.memory_space<smem>>) -> (i32, i32) {
    %c0_i32 = arith.constant 0 : i32
    %c0_i32_0 = arith.constant 0 : i32
    %c0_i32_1 = arith.constant 0 : i32
    return %c0_i32, %c0_i32_0 : i32, i32
  }
  func.func @transform_3(%arg0: i32, %arg1: memref<2xf32, #tpu.memory_space<smem>>) -> (i32, i32) {
    %c0_i32 = arith.constant 0 : i32
    %c0_i32_0 = arith.constant 0 : i32
    %c0_i32_1 = arith.constant 0 : i32
    return %c0_i32, %c0_i32_0 : i32, i32
  }
  func.func @transform_4(%arg0: i32, %arg1: memref<2xf32, #tpu.memory_space<smem>>) -> (i32, i32) {
    %c0_i32 = arith.constant 0 : i32
    %c0_i32_0 = arith.constant 0 : i32
    %c0_i32_1 = arith.constant 0 : i32
    return %c0_i32, %c0_i32_0 : i32, i32
  }
  func.func @transform_5(%arg0: i32, %arg1: memref<2xf32, #tpu.memory_space<smem>>) -> (i32, i32) {
    %c0_i32 = arith.constant 0 : i32
    %c0_i32_0 = arith.constant 0 : i32
    %c0_i32_1 = arith.constant 0 : i32
    return %c0_i32, %c0_i32_0 : i32, i32
  }
  func.func @transform_6(%arg0: i32, %arg1: memref<2xf32, #tpu.memory_space<smem>>) -> (i32, i32) {
    %c0_i32 = arith.constant 0 : i32
    %c0_i32_0 = arith.constant 0 : i32
    %c0_i32_1 = arith.constant 0 : i32
    return %c0_i32, %c0_i32_0 : i32, i32
  }
  func.func @transform_7(%arg0: i32, %arg1: memref<2xf32, #tpu.memory_space<smem>>) -> (i32, i32) {
    %c0_i32 = arith.constant 0 : i32
    %c0_i32_0 = arith.constant 0 : i32
    %c0_i32_1 = arith.constant 0 : i32
    return %c0_i32, %c0_i32_0 : i32, i32
  }
  func.func @transform_8(%arg0: i32, %arg1: memref<2xf32, #tpu.memory_space<smem>>) -> (i32, i32) {
    %c0_i32 = arith.constant 0 : i32
    %c0_i32_0 = arith.constant 0 : i32
    %c0_i32_1 = arith.constant 0 : i32
    return %c0_i32, %c0_i32_0 : i32, i32
  }
  func.func @transform_9(%arg0: i32, %arg1: memref<2xf32, #tpu.memory_space<smem>>) -> (i32, i32) {
    %c0_i32 = arith.constant 0 : i32
    %c0_i32_0 = arith.constant 0 : i32
    %c0_i32_1 = arith.constant 0 : i32
    return %c0_i32, %c0_i32_0 : i32, i32
  }
  func.func @transform_10(%arg0: i32, %arg1: memref<2xf32, #tpu.memory_space<smem>>) -> (i32, i32) {
    %c0_i32 = arith.constant 0 : i32
    %c0_i32_0 = arith.constant 0 : i32
    %c0_i32_1 = arith.constant 0 : i32
    return %c0_i32, %c0_i32_0 : i32, i32
  }
  func.func @transform_11(%arg0: i32, %arg1: memref<2xf32, #tpu.memory_space<smem>>) -> (i32, i32) {
    %c0_i32 = arith.constant 0 : i32
    %c0_i32_0 = arith.constant 0 : i32
    %c0_i32_1 = arith.constant 0 : i32
    return %c0_i32, %c0_i32_0 : i32, i32
  }
  func.func @transform_12(%arg0: i32, %arg1: memref<2xf32, #tpu.memory_space<smem>>) -> (i32, i32) {
    %c0_i32 = arith.constant 0 : i32
    %c0_i32_0 = arith.constant 0 : i32
    %c0_i32_1 = arith.constant 0 : i32
    return %c0_i32, %c0_i32_0 : i32, i32
  }
  func.func @transform_13(%arg0: i32, %arg1: memref<2xf32, #tpu.memory_space<smem>>) -> (i32, i32) {
    %c0_i32 = arith.constant 0 : i32
    %c0_i32_0 = arith.constant 0 : i32
    %c0_i32_1 = arith.constant 0 : i32
    return %c0_i32, %c0_i32_0 : i32, i32
  }
  func.func @transform_14(%arg0: i32, %arg1: memref<2xf32, #tpu.memory_space<smem>>) -> (i32, i32) {
    %c0_i32 = arith.constant 0 : i32
    %c0_i32_0 = arith.constant 0 : i32
    %c0_i32_1 = arith.constant 0 : i32
    return %c0_i32, %c0_i32_0 : i32, i32
  }
  func.func @transform_15(%arg0: i32, %arg1: memref<2xf32, #tpu.memory_space<smem>>) -> (i32, i32) {
    %c0_i32 = arith.constant 0 : i32
    %c0_i32_0 = arith.constant 0 : i32
    %c0_i32_1 = arith.constant 0 : i32
    return %c0_i32, %c0_i32_0 : i32, i32
  }
  func.func @transform_16(%arg0: i32, %arg1: memref<2xf32, #tpu.memory_space<smem>>) -> (i32, i32, i32) {
    %c0_i32 = arith.constant 0 : i32
    %c0_i32_0 = arith.constant 0 : i32
    %c0_i32_1 = arith.constant 0 : i32
    return %arg0, %c0_i32, %c0_i32_0 : i32, i32, i32
  }
}

</mosaic_0001>

<llo_original>
// kernel: _lambda_.1
$region0: #{_lambda_.1}
  #allocation0 [shape = 'u32[]', space=smem, size = 0x4, offset = 0x4, fixed_abs, tag = 'smem constant byte address 0x4 - core index']
  #allocation1 [shape = 'u32[144,128]{1,0:T(1,128)}', space=vmem, size = 0x12000, scoped, tag = 'internal scratch']
  #allocation2 [shape = 's32[1]{0}', space=sflag, size = 0x4, scoped, tag = 'scoped memory for _lambda_.1']
  #allocation3 [shape = 'u8[512]{0}', space=smem, size = 0x200, scoped, tag = 'prefetched SMEM operand 0']
  %s0 = inlined_call_operand.vmem [shape: f32[2], index: 0, kind: input, shape index: {}]
  %s1 = inlined_call_operand.vmem [shape: f32[2,8,256], index: 1, kind: input, shape index: {}]
  %s2 = inlined_call_operand.vmem [shape: f32[2,8,256], index: 2, kind: input, shape index: {}]
  %s3 = inlined_call_operand.vmem [shape: f32[8,256], index: 3, kind: input, shape index: {}]
  %s4 = inlined_call_operand.hbm [shape: bf16[32,72], index: 4, kind: input, shape index: {}]
  %s5 = inlined_call_operand.hbm [shape: f32[32,1], index: 5, kind: input, shape index: {}]
  %s6 = inlined_call_operand.hbm [shape: f32[32,8], index: 6, kind: input, shape index: {}]
  %s7 = inlined_call_operand.hbm [shape: f32[32,1], index: 7, kind: input, shape index: {}]
  %s8 = inlined_call_operand.hbm [shape: f32[32,32], index: 8, kind: input, shape index: {}]
  %s9 = inlined_call_operand.hbm [shape: f32[32,1], index: 9, kind: input, shape index: {}]
  %s10 = inlined_call_operand.vmem [shape: f32[1,32], index: 10, kind: input, shape index: {}]
  %s11 = inlined_call_operand.vmem [shape: f32[1,32], index: 11, kind: input, shape index: {}]
  %s12 = inlined_call_operand.vmem [shape: f32[32,1], index: 12, kind: input, shape index: {}]
  %s13 = inlined_call_operand.vmem [shape: f32[32,1], index: 13, kind: input, shape index: {}]
  %s14 = inlined_call_operand.vmem [shape: bf16[288,32], index: 14, kind: input, shape index: {}]
  %s15 = inlined_call_operand.vmem [shape: bf16[288,32], index: 15, kind: input, shape index: {}]
  %s16 = inlined_call_operand.vmem [shape: f32[32,1], index: 16, kind: input, shape index: {}]
  %s17 = inlined_call_operand.vmem [shape: f32[2,32,256], index: 17, kind: output, shape index: {}]
  %s18 = sld [smem:[#allocation0]]
  $region121: #{_lambda_.1} parent=0
    _
  %s20 = ssub.s32 1, %s18
  %s21 = scalar_select 0, %s20, %s18
  %s22 = sshll.u32 %s0, 4
  %s23 = int_to_ptr.vmem [resolvable:$true] %s22
  %25 = dma.vmem_to_smem %s23, 16, [#allocation3], [#allocation2]
  %26 = dma.done [#allocation2], 16
  %27 = sfence
  $region1: #{_lambda_.1} parent=0
    #allocation4 [shape = 'u8[8192]{0}', space=vmem, size = 0x2000, scoped, tag = 'input window, operand 4, single buffered']
    #allocation5 [shape = 's32[2]{0}', space=sflag, size = 0x8, scoped, tag = 'scoped memory for _lambda_.1']
    #allocation6 [shape = 'u8[16384]{0}', space=vmem, size = 0x4000, scoped, tag = 'input window, operand 5, single buffered']
    #allocation7 [shape = 's32[1]{0}', space=sflag, size = 0x4, scoped, tag = 'scoped memory for _lambda_.1']
    #allocation8 [shape = 'u8[16384]{0}', space=vmem, size = 0x4000, scoped, tag = 'input window, operand 6, single buffered']
    #allocation9 [shape = 'u8[16384]{0}', space=vmem, size = 0x4000, scoped, tag = 'input window, operand 7, single buffered']
    #allocation10 [shape = 's32[1]{0}', space=sflag, size = 0x4, scoped, tag = 'scoped memory for _lambda_.1']
    #allocation11 [shape = 'u8[16384]{0}', space=vmem, size = 0x4000, scoped, tag = 'input window, operand 8, single buffered']
    #allocation12 [shape = 'u8[16384]{0}', space=vmem, size = 0x4000, scoped, tag = 'input window, operand 9, single buffered']
    #allocation13 [shape = 's32[1]{0}', space=sflag, size = 0x4, scoped, tag = 'scoped memory for _lambda_.1']
    %28 = vsyncpa [#allocation5], 0
    %29 = vsyncpa [#allocation7], 0
    %30 = vsyncpa [#allocation10], 0
    %31 = vsyncpa [#allocation13], 0
    loop: start=0, step=1, limit=4
    $region2: #{_lambda_.1} parent=1 // loop_pre_header
      _
    $region3: #{_lambda_.1} parent=1 // loop_header
      %s33 = sphi 0, %s37
      %p34 = scmp.ge.s32.totalorder %s33, 4
      %s43 = sphi 0, %s45
      %s46 = sphi 0, %s43
      %s47 = sphi 0, %s46
      %s63 = sphi 0, %s47
      %s69 = sphi 0, %s71
      %s72 = sphi 0, %s69
      %s73 = sphi 0, %s72
      %s89 = sphi 0, %s73
      %s93 = sphi 0, %s93
      %s95 = sphi 0, %s93
      %s96 = sphi 0, %s95
      %s110 = sphi 0, %s96
      %s114 = sphi 0, %s114
      %s116 = sphi 0, %s114
      %s117 = sphi 0, %s116
      %s131 = sphi 0, %s117
      %s135 = sphi 0, %s135
      %s137 = sphi 0, %s135
      %s138 = sphi 0, %s137
      %s152 = sphi 0, %s138
      %s156 = sphi 0, %s156
      %s158 = sphi 0, %s156
      %s159 = sphi 0, %s158
      %s173 = sphi 0, %s159
      %s177 = sphi 0, %s177
      %s179 = sphi 0, %s177
      %s180 = sphi 0, %s179
      %s194 = sphi 0, %s180
      %s198 = sphi 0, %s198
      %s200 = sphi 0, %s198
      %s201 = sphi 0, %s200
      %s215 = sphi 0, %s201
      %s219 = sphi 0, %s219
      %s221 = sphi 0, %s219
      %s222 = sphi 0, %s221
      %s236 = sphi 0, %s222
      %s240 = sphi 0, %s240
      %s242 = sphi 0, %s240
      %s243 = sphi 0, %s242
      %s257 = sphi 0, %s243
      %s261 = sphi 0, %s261
      %s263 = sphi 0, %s261
      %s264 = sphi 0, %s263
      %s278 = sphi 0, %s264
      %s282 = sphi 0, %s282
      %s284 = sphi 0, %s282
      %s285 = sphi 0, %s284
      %s299 = sphi 0, %s285
      %s303 = sphi 0, %s303
      %s305 = sphi 0, %s303
      %s306 = sphi 0, %s305
      %s320 = sphi 0, %s306
      %s324 = sphi 0, %s324
      %s326 = sphi 0, %s324
      %s327 = sphi 0, %s326
      %s341 = sphi 0, %s327
      %s345 = sphi 0, %s345
      %s347 = sphi 0, %s345
      %s348 = sphi 0, %s347
      %s362 = sphi 0, %s348
      %s366 = sphi 0, %s366
      %s368 = sphi 0, %s366
      %s369 = sphi 0, %s368
      %s383 = sphi 0, %s369
      %s389 = sphi 0, %s391
      %s392 = sphi 0, %s389
      %s393 = sphi 0, %s392
      %s409 = sphi 0, %s393
    $region4: #{_lambda_.1} parent=1 // loop_header_branch
      %36 = sbr.rel (%p34) target = $region8
    $region5: #{_lambda_.1} parent=1 // loop_body
      %s38 = ssub.s32 %s33, 1
      %s39 = ssub.s32 %s33, 2
      %s40 = sadd.s32 %s33, 1
      %s41 = ssub.s32 %s33, %s40
      %p42 = scmp.eq.s32.totalorder %s41, 0
      %s44 = sadd.s32 %s43, 1
      %s45 = scalar_select %p42, %s43, %s44
      %p48 = pneg %p42
      %p49 = scmp.eq.s32.totalorder %s33, 1
      %p50 = por %p48, %p49
      %p51 = scmp.ne.s32.totalorder %s43, %s46
      %p52 = scmp.eq.s32.totalorder %s33, 0
      %p53 = por %p51, %p52
      %p54 = scmp.ne.s32.totalorder %s43, %s46
      %p55 = scmp.eq.s32.totalorder %s38, 1
      %p56 = por %p54, %p55
      %p57 = scmp.ne.s32.totalorder %s46, %s47
      %p58 = scmp.eq.s32.totalorder %s38, 0
      %p59 = por %p57, %p58
      %p60 = scmp.ne.s32.totalorder %s46, %s47
      %p61 = scmp.eq.s32.totalorder %s39, 1
      %p62 = por %p60, %p61
      %p64 = scmp.ne.s32.totalorder %s47, %s63
      %p65 = scmp.eq.s32.totalorder %s39, 0
      %p66 = por %p64, %p65
      %s67 = ssub.s32 %s33, %s40
      %p68 = scmp.eq.s32.totalorder %s67, 0
      %s70 = sadd.s32 %s69, 1
      %s71 = scalar_select %p68, %s69, %s70
      %p74 = pneg %p68
      %p75 = scmp.eq.s32.totalorder %s33, 1
      %p76 = por %p74, %p75
      %p77 = scmp.ne.s32.totalorder %s69, %s72
      %p78 = scmp.eq.s32.totalorder %s33, 0
      %p79 = por %p77, %p78
      %p80 = scmp.ne.s32.totalorder %s69, %s72
      %p81 = scmp.eq.s32.totalorder %s38, 1
      %p82 = por %p80, %p81
      %p83 = scmp.ne.s32.totalorder %s72, %s73
      %p84 = scmp.eq.s32.totalorder %s38, 0
      %p85 = por %p83, %p84
      %p86 = scmp.ne.s32.totalorder %s72, %s73
      %p87 = scmp.eq.s32.totalorder %s39, 1
      %p88 = por %p86, %p87
      %p90 = scmp.ne.s32.totalorder %s73, %s89
      %p91 = scmp.eq.s32.totalorder %s39, 0
      %p92 = por %p90, %p91
      %s94 = sadd.s32 %s93, 1
      %p97 = scmp.eq.s32.totalorder %s33, 1
      %p98 = scmp.ne.s32.totalorder %s93, %s95
      %p99 = scmp.eq.s32.totalorder %s33, 0
      %p100 = por %p98, %p99
      %p101 = scmp.ne.s32.totalorder %s93, %s95
      %p102 = scmp.eq.s32.totalorder %s38, 1
      %p103 = por %p101, %p102
      %p104 = scmp.ne.s32.totalorder %s95, %s96
      %p105 = scmp.eq.s32.totalorder %s38, 0
      %p106 = por %p104, %p105
      %p107 = scmp.ne.s32.totalorder %s95, %s96
      %p108 = scmp.eq.s32.totalorder %s39, 1
      %p109 = por %p107, %p108
      %p111 = scmp.ne.s32.totalorder %s96, %s110
      %p112 = scmp.eq.s32.totalorder %s39, 0
      %p113 = por %p111, %p112
      %s115 = sadd.s32 %s114, 1
      %p118 = scmp.eq.s32.totalorder %s33, 1
      %p119 = scmp.ne.s32.totalorder %s114, %s116
      %p120 = scmp.eq.s32.totalorder %s33, 0
      %p121 = por %p119, %p120
      %p122 = scmp.ne.s32.totalorder %s114, %s116
      %p123 = scmp.eq.s32.totalorder %s38, 1
      %p124 = por %p122, %p123
      %p125 = scmp.ne.s32.totalorder %s116, %s117
      %p126 = scmp.eq.s32.totalorder %s38, 0
      %p127 = por %p125, %p126
      %p128 = scmp.ne.s32.totalorder %s116, %s117
      %p129 = scmp.eq.s32.totalorder %s39, 1
      %p130 = por %p128, %p129
      %p132 = scmp.ne.s32.totalorder %s117, %s131
      %p133 = scmp.eq.s32.totalorder %s39, 0
      %p134 = por %p132, %p133
      %s136 = sadd.s32 %s135, 1
      %p139 = scmp.eq.s32.totalorder %s33, 1
      %p140 = scmp.ne.s32.totalorder %s135, %s137
      %p141 = scmp.eq.s32.totalorder %s33, 0
      %p142 = por %p140, %p141
      %p143 = scmp.ne.s32.totalorder %s135, %s137
      %p144 = scmp.eq.s32.totalorder %s38, 1
      %p145 = por %p143, %p144
      %p146 = scmp.ne.s32.totalorder %s137, %s138
      %p147 = scmp.eq.s32.totalorder %s38, 0
      %p148 = por %p146, %p147
      %p149 = scmp.ne.s32.totalorder %s137, %s138
      %p150 = scmp.eq.s32.totalorder %s39, 1
      %p151 = por %p149, %p150
      %p153 = scmp.ne.s32.totalorder %s138, %s152
      %p154 = scmp.eq.s32.totalorder %s39, 0
      %p155 = por %p153, %p154
      %s157 = sadd.s32 %s156, 1
      %p160 = scmp.eq.s32.totalorder %s33, 1
      %p161 = scmp.ne.s32.totalorder %s156, %s158
      %p162 = scmp.eq.s32.totalorder %s33, 0
      %p163 = por %p161, %p162
      %p164 = scmp.ne.s32.totalorder %s156, %s158
      %p165 = scmp.eq.s32.totalorder %s38, 1
      %p166 = por %p164, %p165
      %p167 = scmp.ne.s32.totalorder %s158, %s159
      %p168 = scmp.eq.s32.totalorder %s38, 0
      %p169 = por %p167, %p168
      %p170 = scmp.ne.s32.totalorder %s158, %s159
      %p171 = scmp.eq.s32.totalorder %s39, 1
      %p172 = por %p170, %p171
      %p174 = scmp.ne.s32.totalorder %s159, %s173
      %p175 = scmp.eq.s32.totalorder %s39, 0
      %p176 = por %p174, %p175
      %s178 = sadd.s32 %s177, 1
      %p181 = scmp.eq.s32.totalorder %s33, 1
      %p182 = scmp.ne.s32.totalorder %s177, %s179
      %p183 = scmp.eq.s32.totalorder %s33, 0
      %p184 = por %p182, %p183
      %p185 = scmp.ne.s32.totalorder %s177, %s179
      %p186 = scmp.eq.s32.totalorder %s38, 1
      %p187 = por %p185, %p186
      %p188 = scmp.ne.s32.totalorder %s179, %s180
      %p189 = scmp.eq.s32.totalorder %s38, 0
      %p190 = por %p188, %p189
      %p191 = scmp.ne.s32.totalorder %s179, %s180
      %p192 = scmp.eq.s32.totalorder %s39, 1
      %p193 = por %p191, %p192
      %p195 = scmp.ne.s32.totalorder %s180, %s194
      %p196 = scmp.eq.s32.totalorder %s39, 0
      %p197 = por %p195, %p196
      %s199 = sadd.s32 %s198, 1
      %p202 = scmp.eq.s32.totalorder %s33, 1
      %p203 = scmp.ne.s32.totalorder %s198, %s200
      %p204 = scmp.eq.s32.totalorder %s33, 0
      %p205 = por %p203, %p204
      %p206 = scmp.ne.s32.totalorder %s198, %s200
      %p207 = scmp.eq.s32.totalorder %s38, 1
      %p208 = por %p206, %p207
      %p209 = scmp.ne.s32.totalorder %s200, %s201
      %p210 = scmp.eq.s32.totalorder %s38, 0
      %p211 = por %p209, %p210
      %p212 = scmp.ne.s32.totalorder %s200, %s201
      %p213 = scmp.eq.s32.totalorder %s39, 1
      %p214 = por %p212, %p213
      %p216 = scmp.ne.s32.totalorder %s201, %s215
      %p217 = scmp.eq.s32.totalorder %s39, 0
      %p218 = por %p216, %p217
      %s220 = sadd.s32 %s219, 1
      %p223 = scmp.eq.s32.totalorder %s33, 1
      %p224 = scmp.ne.s32.totalorder %s219, %s221
      %p225 = scmp.eq.s32.totalorder %s33, 0
      %p226 = por %p224, %p225
      %p227 = scmp.ne.s32.totalorder %s219, %s221
      %p228 = scmp.eq.s32.totalorder %s38, 1
      %p229 = por %p227, %p228
      %p230 = scmp.ne.s32.totalorder %s221, %s222
      %p231 = scmp.eq.s32.totalorder %s38, 0
      %p232 = por %p230, %p231
      %p233 = scmp.ne.s32.totalorder %s221, %s222
      %p234 = scmp.eq.s32.totalorder %s39, 1
      %p235 = por %p233, %p234
      %p237 = scmp.ne.s32.totalorder %s222, %s236
      %p238 = scmp.eq.s32.totalorder %s39, 0
      %p239 = por %p237, %p238
      %s241 = sadd.s32 %s240, 1
      %p244 = scmp.eq.s32.totalorder %s33, 1
      %p245 = scmp.ne.s32.totalorder %s240, %s242
      %p246 = scmp.eq.s32.totalorder %s33, 0
      %p247 = por %p245, %p246
      %p248 = scmp.ne.s32.totalorder %s240, %s242
      %p249 = scmp.eq.s32.totalorder %s38, 1
      %p250 = por %p248, %p249
      %p251 = scmp.ne.s32.totalorder %s242, %s243
      %p252 = scmp.eq.s32.totalorder %s38, 0
      %p253 = por %p251, %p252
      %p254 = scmp.ne.s32.totalorder %s242, %s243
      %p255 = scmp.eq.s32.totalorder %s39, 1
      %p256 = por %p254, %p255
      %p258 = scmp.ne.s32.totalorder %s243, %s257
      %p259 = scmp.eq.s32.totalorder %s39, 0
      %p260 = por %p258, %p259
      %s262 = sadd.s32 %s261, 1
      %p265 = scmp.eq.s32.totalorder %s33, 1
      %p266 = scmp.ne.s32.totalorder %s261, %s263
      %p267 = scmp.eq.s32.totalorder %s33, 0
      %p268 = por %p266, %p267
      %p269 = scmp.ne.s32.totalorder %s261, %s263
      %p270 = scmp.eq.s32.totalorder %s38, 1
      %p271 = por %p269, %p270
      %p272 = scmp.ne.s32.totalorder %s263, %s264
      %p273 = scmp.eq.s32.totalorder %s38, 0
      %p274 = por %p272, %p273
      %p275 = scmp.ne.s32.totalorder %s263, %s264
      %p276 = scmp.eq.s32.totalorder %s39, 1
      %p277 = por %p275, %p276
      %p279 = scmp.ne.s32.totalorder %s264, %s278
      %p280 = scmp.eq.s32.totalorder %s39, 0
      %p281 = por %p279, %p280
      %s283 = sadd.s32 %s282, 1
      %p286 = scmp.eq.s32.totalorder %s33, 1
      %p287 = scmp.ne.s32.totalorder %s282, %s284
      %p288 = scmp.eq.s32.totalorder %s33, 0
      %p289 = por %p287, %p288
      %p290 = scmp.ne.s32.totalorder %s282, %s284
      %p291 = scmp.eq.s32.totalorder %s38, 1
      %p292 = por %p290, %p291
      %p293 = scmp.ne.s32.totalorder %s284, %s285
      %p294 = scmp.eq.s32.totalorder %s38, 0
      %p295 = por %p293, %p294
      %p296 = scmp.ne.s32.totalorder %s284, %s285
      %p297 = scmp.eq.s32.totalorder %s39, 1
      %p298 = por %p296, %p297
      %p300 = scmp.ne.s32.totalorder %s285, %s299
      %p301 = scmp.eq.s32.totalorder %s39, 0
      %p302 = por %p300, %p301
      %s304 = sadd.s32 %s303, 1
      %p307 = scmp.eq.s32.totalorder %s33, 1
      %p308 = scmp.ne.s32.totalorder %s303, %s305
      %p309 = scmp.eq.s32.totalorder %s33, 0
      %p310 = por %p308, %p309
      %p311 = scmp.ne.s32.totalorder %s303, %s305
      %p312 = scmp.eq.s32.totalorder %s38, 1
      %p313 = por %p311, %p312
      %p314 = scmp.ne.s32.totalorder %s305, %s306
      %p315 = scmp.eq.s32.totalorder %s38, 0
      %p316 = por %p314, %p315
      %p317 = scmp.ne.s32.totalorder %s305, %s306
      %p318 = scmp.eq.s32.totalorder %s39, 1
      %p319 = por %p317, %p318
      %p321 = scmp.ne.s32.totalorder %s306, %s320
      %p322 = scmp.eq.s32.totalorder %s39, 0
      %p323 = por %p321, %p322
      %s325 = sadd.s32 %s324, 1
      %p328 = scmp.eq.s32.totalorder %s33, 1
      %p329 = scmp.ne.s32.totalorder %s324, %s326
      %p330 = scmp.eq.s32.totalorder %s33, 0
      %p331 = por %p329, %p330
      %p332 = scmp.ne.s32.totalorder %s324, %s326
      %p333 = scmp.eq.s32.totalorder %s38, 1
      %p334 = por %p332, %p333
      %p335 = scmp.ne.s32.totalorder %s326, %s327
      %p336 = scmp.eq.s32.totalorder %s38, 0
      %p337 = por %p335, %p336
      %p338 = scmp.ne.s32.totalorder %s326, %s327
      %p339 = scmp.eq.s32.totalorder %s39, 1
      %p340 = por %p338, %p339
      %p342 = scmp.ne.s32.totalorder %s327, %s341
      %p343 = scmp.eq.s32.totalorder %s39, 0
      %p344 = por %p342, %p343
      %s346 = sadd.s32 %s345, 1
      %p349 = scmp.eq.s32.totalorder %s33, 1
      %p350 = scmp.ne.s32.totalorder %s345, %s347
      %p351 = scmp.eq.s32.totalorder %s33, 0
      %p352 = por %p350, %p351
      %p353 = scmp.ne.s32.totalorder %s345, %s347
      %p354 = scmp.eq.s32.totalorder %s38, 1
      %p355 = por %p353, %p354
      %p356 = scmp.ne.s32.totalorder %s347, %s348
      %p357 = scmp.eq.s32.totalorder %s38, 0
      %p358 = por %p356, %p357
      %p359 = scmp.ne.s32.totalorder %s347, %s348
      %p360 = scmp.eq.s32.totalorder %s39, 1
      %p361 = por %p359, %p360
      %p363 = scmp.ne.s32.totalorder %s348, %s362
      %p364 = scmp.eq.s32.totalorder %s39, 0
      %p365 = por %p363, %p364
      %s367 = sadd.s32 %s366, 1
      %p370 = scmp.eq.s32.totalorder %s33, 1
      %p371 = scmp.ne.s32.totalorder %s366, %s368
      %p372 = scmp.eq.s32.totalorder %s33, 0
      %p373 = por %p371, %p372
      %p374 = scmp.ne.s32.totalorder %s366, %s368
      %p375 = scmp.eq.s32.totalorder %s38, 1
      %p376 = por %p374, %p375
      %p377 = scmp.ne.s32.totalorder %s368, %s369
      %p378 = scmp.eq.s32.totalorder %s38, 0
      %p379 = por %p377, %p378
      %p380 = scmp.ne.s32.totalorder %s368, %s369
      %p381 = scmp.eq.s32.totalorder %s39, 1
      %p382 = por %p380, %p381
      %p384 = scmp.ne.s32.totalorder %s369, %s383
      %p385 = scmp.eq.s32.totalorder %s39, 0
      %p386 = por %p384, %p385
      %s387 = ssub.s32 %s33, %s40
      %p388 = scmp.eq.s32.totalorder %s387, 0
      %s390 = sadd.s32 %s389, 1
      %s391 = scalar_select %p388, %s389, %s390
      %p394 = pneg %p388
      %p395 = scmp.eq.s32.totalorder %s33, 1
      %p396 = por %p394, %p395
      %p397 = scmp.ne.s32.totalorder %s389, %s392
      %p398 = scmp.eq.s32.totalorder %s33, 0
      %p399 = por %p397, %p398
      %p400 = scmp.ne.s32.totalorder %s389, %s392
      %p401 = scmp.eq.s32.totalorder %s38, 1
      %p402 = por %p400, %p401
      %p403 = scmp.ne.s32.totalorder %s392, %s393
      %p404 = scmp.eq.s32.totalorder %s38, 0
      %p405 = por %p403, %p404
      %p406 = scmp.ne.s32.totalorder %s392, %s393
      %p407 = scmp.eq.s32.totalorder %s39, 1
      %p408 = por %p406, %p407
      %p410 = scmp.ne.s32.totalorder %s393, %s409
      %p411 = scmp.eq.s32.totalorder %s39, 0
      %p412 = por %p410, %p411
      %p413 = scmp.le.s32.totalorder 1, %s33
      %p414 = scmp.lt.s32.totalorder %s33, 3
      %p415 = pnand %p413, %p414
      %p416 = pneg %p415
      // Predicated region
      $region9: #{_lambda_.1} parent=5 // pred_check
        _
      $region10: #{_lambda_.1} parent=5 // pred_check_branch
        %418 = sbr.rel (%p415) target = $region12
      $region11: #{_lambda_.1} parent=5 // pred_region
        %s419 = ssub.s32 %s33, 1
        // Predicated region
        $region13: #{_lambda_.1} parent=11 // pred_check
          %p420 = pneg %p106
        $region14: #{_lambda_.1} parent=11 // pred_check_branch
          %422 = sbr.rel (%p420) target = $region16
        $region15: #{_lambda_.1} parent=11 // pred_region
          _
        $region16: #{_lambda_.1} parent=11 // pred_fallthru
          _
        // Predicated region
        $region17: #{_lambda_.1} parent=11 // pred_check
          %p423 = pneg %p127
        $region18: #{_lambda_.1} parent=11 // pred_check_branch
          %425 = sbr.rel (%p423) target = $region20
        $region19: #{_lambda_.1} parent=11 // pred_region
          %s427 = ssub.s32 256, 256
          %428 = vsyncadd [#allocation5], %s427
          %s429 = sshll.u32 [#allocation4], 4
          %s430 = int_to_ptr.vmem [resolvable:$true] %s429
          %435 = dma.hbm_to_vmem [thread:$0]  %s4, 256, %s430, [#allocation5], 64, 64, 4
        $region20: #{_lambda_.1} parent=11 // pred_fallthru
          _
        // Predicated region
        $region21: #{_lambda_.1} parent=11 // pred_check
          %p436 = pneg %p148
        $region22: #{_lambda_.1} parent=11 // pred_check_branch
          %438 = sbr.rel (%p436) target = $region24
        $region23: #{_lambda_.1} parent=11 // pred_region
          %s440 = ssub.s32 512, 512
          %441 = vsyncadd [#allocation7], %s440
          %s442 = sshll.u32 [#allocation6], 4
          %s443 = int_to_ptr.vmem [resolvable:$true] %s442
          %448 = dma.hbm_to_vmem [thread:$0]  %s5, 512, %s443, [#allocation7], 128, 128, 8
        $region24: #{_lambda_.1} parent=11 // pred_fallthru
          _
        // Predicated region
        $region25: #{_lambda_.1} parent=11 // pred_check
          %p449 = pneg %p169
        $region26: #{_lambda_.1} parent=11 // pred_check_branch
          %451 = sbr.rel (%p449) target = $region28
        $region27: #{_lambda_.1} parent=11 // pred_region
          %s453 = ssub.s32 512, 512
          %454 = vsyncadd [#allocation7], %s453
          %s455 = sshll.u32 [#allocation8], 4
          %s456 = int_to_ptr.vmem [resolvable:$true] %s455
          %461 = dma.hbm_to_vmem [thread:$0]  %s6, 512, %s456, [#allocation7], 128, 128, 8
        $region28: #{_lambda_.1} parent=11 // pred_fallthru
          _
        // Predicated region
        $region29: #{_lambda_.1} parent=11 // pred_check
          %p462 = pneg %p190
        $region30: #{_lambda_.1} parent=11 // pred_check_branch
          %464 = sbr.rel (%p462) target = $region32
        $region31: #{_lambda_.1} parent=11 // pred_region
          %s466 = ssub.s32 512, 512
          %467 = vsyncadd [#allocation10], %s466
          %s468 = sshll.u32 [#allocation9], 4
          %s469 = int_to_ptr.vmem [resolvable:$true] %s468
          %474 = dma.hbm_to_vmem [thread:$0]  %s7, 512, %s469, [#allocation10], 128, 128, 8
        $region32: #{_lambda_.1} parent=11 // pred_fallthru
          _
        // Predicated region
        $region33: #{_lambda_.1} parent=11 // pred_check
          %p475 = pneg %p211
        $region34: #{_lambda_.1} parent=11 // pred_check_branch
          %477 = sbr.rel (%p475) target = $region36
        $region35: #{_lambda_.1} parent=11 // pred_region
          %s479 = ssub.s32 512, 512
          %480 = vsyncadd [#allocation10], %s479
          %s481 = sshll.u32 [#allocation11], 4
          %s482 = int_to_ptr.vmem [resolvable:$true] %s481
          %487 = dma.hbm_to_vmem [thread:$0]  %s8, 512, %s482, [#allocation10], 128, 128, 8
        $region36: #{_lambda_.1} parent=11 // pred_fallthru
          _
        // Predicated region
        $region37: #{_lambda_.1} parent=11 // pred_check
          %p488 = pneg %p232
        $region38: #{_lambda_.1} parent=11 // pred_check_branch
          %490 = sbr.rel (%p488) target = $region40
        $region39: #{_lambda_.1} parent=11 // pred_region
          %s492 = ssub.s32 512, 512
          %493 = vsyncadd [#allocation13], %s492
          %s494 = sshll.u32 [#allocation12], 4
          %s495 = int_to_ptr.vmem [resolvable:$true] %s494
          %500 = dma.hbm_to_vmem [thread:$0]  %s9, 512, %s495, [#allocation13], 128, 128, 8
        $region40: #{_lambda_.1} parent=11 // pred_fallthru
          _
        // Predicated region
        $region41: #{_lambda_.1} parent=11 // pred_check
          %p501 = pneg %p253
        $region42: #{_lambda_.1} parent=11 // pred_check_branch
          %503 = sbr.rel (%p501) target = $region44
        $region43: #{_lambda_.1} parent=11 // pred_region
          _
        $region44: #{_lambda_.1} parent=11 // pred_fallthru
          _
        // Predicated region
        $region45: #{_lambda_.1} parent=11 // pred_check
          %p504 = pneg %p274
        $region46: #{_lambda_.1} parent=11 // pred_check_branch
          %506 = sbr.rel (%p504) target = $region48
        $region47: #{_lambda_.1} parent=11 // pred_region
          _
        $region48: #{_lambda_.1} parent=11 // pred_fallthru
          _
        // Predicated region
        $region49: #{_lambda_.1} parent=11 // pred_check
          %p507 = pneg %p295
        $region50: #{_lambda_.1} parent=11 // pred_check_branch
          %509 = sbr.rel (%p507) target = $region52
        $region51: #{_lambda_.1} parent=11 // pred_region
          _
        $region52: #{_lambda_.1} parent=11 // pred_fallthru
          _
        // Predicated region
        $region53: #{_lambda_.1} parent=11 // pred_check
          %p510 = pneg %p316
        $region54: #{_lambda_.1} parent=11 // pred_check_branch
          %512 = sbr.rel (%p510) target = $region56
        $region55: #{_lambda_.1} parent=11 // pred_region
          _
        $region56: #{_lambda_.1} parent=11 // pred_fallthru
          _
        // Predicated region
        $region57: #{_lambda_.1} parent=11 // pred_check
          %p513 = pneg %p337
        $region58: #{_lambda_.1} parent=11 // pred_check_branch
          %515 = sbr.rel (%p513) target = $region60
        $region59: #{_lambda_.1} parent=11 // pred_region
          _
        $region60: #{_lambda_.1} parent=11 // pred_fallthru
          _
        // Predicated region
        $region61: #{_lambda_.1} parent=11 // pred_check
          %p516 = pneg %p358
        $region62: #{_lambda_.1} parent=11 // pred_check_branch
          %518 = sbr.rel (%p516) target = $region64
        $region63: #{_lambda_.1} parent=11 // pred_region
          _
        $region64: #{_lambda_.1} parent=11 // pred_fallthru
          _
        // Predicated region
        $region65: #{_lambda_.1} parent=11 // pred_check
          %p519 = pneg %p379
        $region66: #{_lambda_.1} parent=11 // pred_check_branch
          %521 = sbr.rel (%p519) target = $region68
        $region67: #{_lambda_.1} parent=11 // pred_region
          _
        $region68: #{_lambda_.1} parent=11 // pred_fallthru
          _
      $region12: #{_lambda_.1} parent=5 // pred_fallthru
        _
      %p522 = scmp.lt.s32.totalorder %s33, 2
      // Predicated region
      $region69: #{_lambda_.1} parent=5 // pred_check
        %p523 = pneg %p522
      $region70: #{_lambda_.1} parent=5 // pred_check_branch
        %525 = sbr.rel (%p523) target = $region72
      $region71: #{_lambda_.1} parent=5 // pred_region
        // Predicated region
        $region73: #{_lambda_.1} parent=71 // pred_check
          %p526 = pneg %p53
        $region74: #{_lambda_.1} parent=71 // pred_check_branch
          %528 = sbr.rel (%p526) target = $region76
        $region75: #{_lambda_.1} parent=71 // pred_region
          %p529 = scmp.lt.s32.totalorder %s33, 1
          %s530 = scalar_select %p529, %s33, 1
          %s531 = smul.addr %s530, 2
          %s532 = smul.addr %s531, 8
          %s533 = scalar_lea.vmem %s1, %s532
        $region76: #{_lambda_.1} parent=71 // pred_fallthru
          _
        // Predicated region
        $region77: #{_lambda_.1} parent=71 // pred_check
          %p534 = pneg %p79
        $region78: #{_lambda_.1} parent=71 // pred_check_branch
          %536 = sbr.rel (%p534) target = $region80
        $region79: #{_lambda_.1} parent=71 // pred_region
          %p537 = scmp.lt.s32.totalorder %s33, 1
          %s538 = scalar_select %p537, %s33, 1
          %s539 = smul.addr %s538, 2
          %s540 = smul.addr %s539, 8
          %s541 = scalar_lea.vmem %s2, %s540
        $region80: #{_lambda_.1} parent=71 // pred_fallthru
          _
      $region72: #{_lambda_.1} parent=5 // pred_fallthru
        _
      %p542 = scmp.le.s32.totalorder 1, %s33
      %p543 = scmp.lt.s32.totalorder %s33, 3
      %p544 = pnand %p542, %p543
      %p545 = pneg %p544
      // Predicated region
      $region81: #{_lambda_.1} parent=5 // pred_check
        _
      $region82: #{_lambda_.1} parent=5 // pred_check_branch
        %547 = sbr.rel (%p544) target = $region84
      $region83: #{_lambda_.1} parent=5 // pred_region
        %s548 = ssub.s32 %s33, 1
        // Predicated region
        $region85: #{_lambda_.1} parent=83 // pred_check
          %p549 = pneg %p127
        $region86: #{_lambda_.1} parent=83 // pred_check_branch
          %551 = sbr.rel (%p549) target = $region88
        $region87: #{_lambda_.1} parent=83 // pred_region
          %552 = dma.done [#allocation5], 256
        $region88: #{_lambda_.1} parent=83 // pred_fallthru
          _
        // Predicated region
        $region89: #{_lambda_.1} parent=83 // pred_check
          %p553 = pneg %p148
        $region90: #{_lambda_.1} parent=83 // pred_check_branch
          %555 = sbr.rel (%p553) target = $region92
        $region91: #{_lambda_.1} parent=83 // pred_region
          %556 = dma.done [#allocation7], 512
        $region92: #{_lambda_.1} parent=83 // pred_fallthru
          _
        // Predicated region
        $region93: #{_lambda_.1} parent=83 // pred_check
          %p557 = pneg %p169
        $region94: #{_lambda_.1} parent=83 // pred_check_branch
          %559 = sbr.rel (%p557) target = $region96
        $region95: #{_lambda_.1} parent=83 // pred_region
          %560 = dma.done [#allocation7], 512
        $region96: #{_lambda_.1} parent=83 // pred_fallthru
          _
        // Predicated region
        $region97: #{_lambda_.1} parent=83 // pred_check
          %p561 = pneg %p190
        $region98: #{_lambda_.1} parent=83 // pred_check_branch
          %563 = sbr.rel (%p561) target = $region100
        $region99: #{_lambda_.1} parent=83 // pred_region
          %564 = dma.done [#allocation10], 512
        $region100: #{_lambda_.1} parent=83 // pred_fallthru
          _
        // Predicated region
        $region101: #{_lambda_.1} parent=83 // pred_check
          %p565 = pneg %p211
        $region102: #{_lambda_.1} parent=83 // pred_check_branch
          %567 = sbr.rel (%p565) target = $region104
        $region103: #{_lambda_.1} parent=83 // pred_region
          %568 = dma.done [#allocation10], 512
        $region104: #{_lambda_.1} parent=83 // pred_fallthru
          _
        // Predicated region
        $region105: #{_lambda_.1} parent=83 // pred_check
          %p569 = pneg %p232
        $region106: #{_lambda_.1} parent=83 // pred_check_branch
          %571 = sbr.rel (%p569) target = $region108
        $region107: #{_lambda_.1} parent=83 // pred_region
          %572 = dma.done [#allocation13], 512
        $region108: #{_lambda_.1} parent=83 // pred_fallthru
          _
        %p573 = scmp.lt.s32.totalorder %s38, 1
        %s574 = scalar_select %p573, %s38, 1
        %s575 = smul.addr %s574, 2
        %s576 = smul.addr %s575, 8
        %s577 = scalar_lea.vmem %s1, %s576
        %p578 = pneg %p59
        %p579 = pneg %p56
        %p580 = scmp.lt.s32.totalorder %s38, 1
        %s581 = scalar_select %p580, %s38, 1
        %s582 = smul.addr %s581, 2
        %s583 = smul.addr %s582, 8
        %s584 = scalar_lea.vmem %s2, %s583
        %p585 = pneg %p85
        %p586 = pneg %p82
        %p587 = pneg %p106
        %p588 = pneg %p103
        %p589 = pneg %p127
        %p590 = pneg %p124
        %p591 = pneg %p148
        %p592 = pneg %p145
        %p593 = pneg %p169
        %p594 = pneg %p166
        %p595 = pneg %p190
        %p596 = pneg %p187
        %p597 = pneg %p211
        %p598 = pneg %p208
        %p599 = pneg %p232
        %p600 = pneg %p229
        %p601 = pneg %p253
        %p602 = pneg %p250
        %p603 = pneg %p274
        %p604 = pneg %p271
        %p605 = pneg %p295
        %p606 = pneg %p292
        %p607 = pneg %p316
        %p608 = pneg %p313
        %p609 = pneg %p337
        %p610 = pneg %p334
        %p611 = pneg %p358
        %p612 = pneg %p355
        %p613 = pneg %p379
        %p614 = pneg %p376
        %p615 = pneg %p405
        %p616 = pneg %p402
        %p617 = scmp.lt.s32.totalorder %s38, 1
        %s618 = scalar_select %p617, %s38, 1
        %s619 = smul.addr %s618, 8
        %s620 = smul.addr %s619, 8
        %s621 = scalar_lea.vmem %s17, %s620
        %p622 = scmp.lt.s32.totalorder %s38, 1
        %s623 = scalar_select %p622, %s38, 1
        %s624 = smul.addr %s623, 2
        %s625 = smul.addr %s624, 8
        %s626 = scalar_lea.vmem %s1, %s625
        %p627 = scmp.lt.s32.totalorder %s38, 1
        %s628 = scalar_select %p627, %s38, 1
        %s629 = smul.addr %s628, 2
        %s630 = smul.addr %s629, 8
        %s631 = scalar_lea.vmem %s2, %s630
        %p632 = scmp.lt.s32.totalorder %s38, 1
        %s633 = scalar_select %p632, %s38, 1
        %s634 = smul.addr %s633, 8
        %s635 = smul.addr %s634, 8
        %s636 = scalar_lea.vmem %s17, %s635
        %v638 = vld [vmem:[%s626] sm:$0xff]
        %v639 = vld [vmem:[%s626 + $0x8] sm:$0xff]
        %v640 = vld [vmem:[%s631] sm:$0xff]
        %v641 = vld [vmem:[%s631 + $0x8] sm:$0xff]
        %v642 = vld [vmem:[%s3] sm:$0xff]
        %v643 = vld [vmem:[%s3 + $0x8] sm:$0xff]
        %s644 = sld [smem:[#allocation3 + %s38]]
        %645 = vrot.lane.b32.xlu0 %v638, 17
        %v646 = vpop.permute.xlu0 %645
        %647 = vrot.lane.b32.xlu0 %v639, 17
        %v648 = vpop.permute.xlu0 %647
        %v649 = vlaneseq
        %v650 = vand.u32 %v649, 127
        %vm651 = vcmp.lt.s32.totalorder %v650, 17
        %v652 = vsel %vm651, %v646, %v648
        %v653 = vsel %vm651, %v648, %v646
        %v654 = vlaneseq
        %v655 = vshrl.u32 %v654, 7
        %v656 = vsub.s32 0, %v655
        %v657 = vrot.slane %v642, %v656
        %v658 = vlaneseq
        %v659 = vshrl.u32 %v658, 7
        %v660 = vsub.s32 0, %v659
        %v661 = vrot.slane %v643, %v660
        %v662 = vmul.f32 %v653, %v657
        %v663 = vmul.f32 %v652, %v661
        %664 = vrot.lane.b32.xlu0 %v638, 16
        %v665 = vpop.permute.xlu0 %664
        %666 = vrot.lane.b32.xlu0 %v639, 16
        %v667 = vpop.permute.xlu0 %666
        %vm668 = vcmp.lt.s32.totalorder %v650, 16
        %v669 = vsel %vm668, %v665, %v667
        %v670 = vsel %vm668, %v667, %v665
        %v671 = vlaneseq
        %v672 = vshrl.u32 %v671, 7
        %v673 = vsub.s32 1, %v672
        %v674 = vrot.slane %v642, %v673
        %v675 = vlaneseq
        %v676 = vshrl.u32 %v675, 7
        %v677 = vsub.s32 1, %v676
        %v678 = vrot.slane %v643, %v677
        %v679 = vmul.f32 %v670, %v674
        %v680 = vmul.f32 %v669, %v678
        %681 = vrot.lane.b32.xlu0 %v638, 15
        %v682 = vpop.permute.xlu0 %681
        %683 = vrot.lane.b32.xlu0 %v639, 15
        %v684 = vpop.permute.xlu0 %683
        %vm685 = vcmp.lt.s32.totalorder %v650, 15
        %v686 = vsel %vm685, %v682, %v684
        %v687 = vsel %vm685, %v684, %v682
        %v688 = vlaneseq
        %v689 = vshrl.u32 %v688, 7
        %v690 = vsub.s32 2, %v689
        %v691 = vrot.slane %v642, %v690
        %v692 = vlaneseq
        %v693 = vshrl.u32 %v692, 7
        %v694 = vsub.s32 2, %v693
        %v695 = vrot.slane %v643, %v694
        %v696 = vmul.f32 %v687, %v691
        %v697 = vmul.f32 %v686, %v695
        %698 = vrot.lane.b32.xlu0 %v638, 1
        %v699 = vpop.permute.xlu0 %698
        %700 = vrot.lane.b32.xlu0 %v639, 1
        %v701 = vpop.permute.xlu0 %700
        %vm702 = vcmp.lt.s32.totalorder %v650, 1
        %v703 = vsel %vm702, %v699, %v701
        %v704 = vsel %vm702, %v701, %v699
        %v705 = vlaneseq
        %v706 = vshrl.u32 %v705, 7
        %v707 = vsub.s32 3, %v706
        %v708 = vrot.slane %v642, %v707
        %v709 = vlaneseq
        %v710 = vshrl.u32 %v709, 7
        %v711 = vsub.s32 3, %v710
        %v712 = vrot.slane %v643, %v711
        %v713 = vmul.f32 %v704, %v708
        %v714 = vmul.f32 %v703, %v712
        %715 = vrot.lane.b32.xlu0 %v638, 127
        %v716 = vpop.permute.xlu0 %715
        %717 = vrot.lane.b32.xlu0 %v639, 127
        %v718 = vpop.permute.xlu0 %717
        %vm719 = vcmp.lt.s32.totalorder %v650, 127
        %v720 = vsel %vm719, %v716, %v718
        %v721 = vsel %vm719, %v718, %v716
        %v722 = vlaneseq
        %v723 = vshrl.u32 %v722, 7
        %v724 = vsub.s32 4, %v723
        %v725 = vrot.slane %v642, %v724
        %v726 = vlaneseq
        %v727 = vshrl.u32 %v726, 7
        %v728 = vsub.s32 4, %v727
        %v729 = vrot.slane %v643, %v728
        %v730 = vmul.f32 %v720, %v725
        %v731 = vmul.f32 %v721, %v729
        %732 = vrot.lane.b32.xlu0 %v638, 113
        %v733 = vpop.permute.xlu0 %732
        %734 = vrot.lane.b32.xlu0 %v639, 113
        %v735 = vpop.permute.xlu0 %734
        %vm736 = vcmp.lt.s32.totalorder %v650, 113
        %v737 = vsel %vm736, %v733, %v735
        %v738 = vsel %vm736, %v735, %v733
        %v739 = vlaneseq
        %v740 = vshrl.u32 %v739, 7
        %v741 = vsub.s32 5, %v740
        %v742 = vrot.slane %v642, %v741
        %v743 = vlaneseq
        %v744 = vshrl.u32 %v743, 7
        %v745 = vsub.s32 5, %v744
        %v746 = vrot.slane %v643, %v745
        %v747 = vmul.f32 %v737, %v742
        %v748 = vmul.f32 %v738, %v746
        %749 = vrot.lane.b32.xlu0 %v638, 112
        %v750 = vpop.permute.xlu0 %749
        %751 = vrot.lane.b32.xlu0 %v639, 112
        %v752 = vpop.permute.xlu0 %751
        %vm753 = vcmp.lt.s32.totalorder %v650, 112
        %v754 = vsel %vm753, %v750, %v752
        %v755 = vsel %vm753, %v752, %v750
        %v756 = vlaneseq
        %v757 = vshrl.u32 %v756, 7
        %v758 = vsub.s32 6, %v757
        %v759 = vrot.slane %v642, %v758
        %v760 = vlaneseq
        %v761 = vshrl.u32 %v760, 7
        %v762 = vsub.s32 6, %v761
        %v763 = vrot.slane %v643, %v762
        %v764 = vmul.f32 %v754, %v759
        %v765 = vmul.f32 %v755, %v763
        %766 = vrot.lane.b32.xlu0 %v638, 111
        %v767 = vpop.permute.xlu0 %766
        %768 = vrot.lane.b32.xlu0 %v639, 111
        %v769 = vpop.permute.xlu0 %768
        %vm770 = vcmp.lt.s32.totalorder %v650, 111
        %v771 = vsel %vm770, %v767, %v769
        %v772 = vsel %vm770, %v769, %v767
        %v773 = vlaneseq
        %v774 = vshrl.u32 %v773, 7
        %v775 = vsub.s32 7, %v774
        %v776 = vrot.slane %v642, %v775
        %v777 = vlaneseq
        %v778 = vshrl.u32 %v777, 7
        %v779 = vsub.s32 7, %v778
        %v780 = vrot.slane %v643, %v779
        %v781 = vmul.f32 %v771, %v776
        %v782 = vmul.f32 %v772, %v780
        %v783 = vpack.c.bf16 %v679, %v662
        %v784 = vpack.c.bf16 %v680, %v663
        %v785 = vpack.c.bf16 %v713, %v696
        %v786 = vpack.c.bf16 %v714, %v697
        %v787 = vpack.c.bf16 %v730, %v638
        %v788 = vpack.c.bf16 %v731, %v639
        %v789 = vpack.c.bf16 %v764, %v747
        %v790 = vpack.c.bf16 %v765, %v748
        %v791 = vpack.c.bf16 %v781, %v781
        %v792 = vpack.c.bf16 %v782, %v782
        %v793 = vld [vmem:[#allocation4] sm:$0xf]
        %v794 = vld [vmem:[#allocation4 + $0x4] sm:$0xf]
        %v795 = vld [vmem:[#allocation4 + $0x8] sm:$0xf]
        %v796 = vld [vmem:[#allocation4 + $0xc] sm:$0xf]
        %v797 = vld [vmem:[#allocation6] sm:$0xff]
        %v798 = vld [vmem:[#allocation6 + $0x8] sm:$0xff]
        %v799 = vld [vmem:[#allocation6 + $0x10] sm:$0xff]
        %v800 = vld [vmem:[#allocation6 + $0x18] sm:$0xff]
        %802 = vset.pattern.permute.xlu0 0
        %803 = vperm.xlu0 %802, %v797
        %v804 = vpop.permute.xlu0 %803
        %807 = vset.pattern.permute.xlu0 0
        %808 = vperm.xlu0 %807, %v798
        %v809 = vpop.permute.xlu0 %808
        %812 = vset.pattern.permute.xlu0 0
        %813 = vperm.xlu0 %812, %v799
        %v814 = vpop.permute.xlu0 %813
        %817 = vset.pattern.permute.xlu0 0
        %818 = vperm.xlu0 %817, %v800
        %v819 = vpop.permute.xlu0 %818
        %v825 = vunpack.c.l.b16 %v793
        %v826 = vunpack.c.l.b16 %v794
        %v827 = vunpack.c.l.b16 %v795
        %v828 = vunpack.c.l.b16 %v796
        %v829 = vpack.c.b16 %v826, %v825
        %v830 = vpack.c.b16 %v828, %v827
        %vm831 = vcmask 588800
        %v833 = vsel %vm831, %v829, 0
        %v836 = vsel %vm831, %v830, 0
        %vm838 = vcmask 1043456
        %v840 = vsel %vm838, %v791, 0
        %v843 = vsel %vm838, %v792, 0
        %845 = vmatprep.subr.bf16.mxu0 0
        %846 = vmatpush1.bf16.msra.mxu0 0
        %847 = vmatprep.subr.bf16.mxu0 0
        %848 = vmatpush1.bf16.msra.mxu0 0
        %849 = vmatprep.subr.bf16.mxu0 0
        %850 = vmatpush1.bf16.msra.mxu0 0
        %851 = vmatprep.subr.bf16.mxu0 %v843
        %852 = vmatpush1.bf16.msra.mxu0 %v840
        %853 = vmatprep.subr.bf16.mxu0 %v790
        %854 = vmatpush1.bf16.msra.mxu0 %v789
        %855 = vmatprep.subr.bf16.mxu0 %v788
        %856 = vmatpush1.bf16.msra.mxu0 %v787
        %857 = vmatprep.subr.bf16.mxu0 %v786
        %858 = vmatpush1.bf16.msra.mxu0 %v785
        %859 = vmatprep.subr.bf16.mxu0 %v784
        %860 = vmatpush1.bf16.msra.mxu0 %v783
        %861 = vmatprep.subr.bf16.mxu0 0
        %862 = vmatpush2.bf16.msra.mxu0 0
        %863 = vmatprep.subr.bf16.mxu0 0
        %864 = vmatpush2.bf16.msra.mxu0 0
        %865 = vmatprep.subr.bf16.mxu0 0
        %866 = vmatpush2.bf16.msra.mxu0 0
        %867 = vmatprep.subr.bf16.mxu0 0
        %868 = vmatpush2.bf16.msra.mxu0 0
        %869 = vmatprep.subr.bf16.mxu0 0
        %870 = vmatpush2.bf16.msra.mxu0 0
        %871 = vmatprep.subr.bf16.mxu0 0
        %872 = vmatpush2.bf16.msra.mxu0 0
        %873 = vmatprep.subr.bf16.mxu0 0
        %874 = vmatpush2.bf16.msra.mxu0 0
        %875 = vmatprep.subr.bf16.mxu0 0
        %876 = vmatpush2.bf16.msra.mxu0 0
        %877 = vmatprep.mubr.bf16.mxu0 0
        %878 = vmatmul.mubr.bf16.gmra.mxu0 %v833
        %v879 = vpop.f32.mrf.mxu0
        %v880 = vadd.f32 %v804, %v879
        %v881 = vpop.f32.mrf.mxu0
        %v882 = vadd.f32 %v804, %v881
        %v883 = vpop.f32.mrf.mxu0
        %v884 = vadd.f32 %v809, %v883
        %v885 = vpop.f32.mrf.mxu0
        %v886 = vadd.f32 %v809, %v885
        %887 = vmatprep.mubr.bf16.mxu0 0
        %888 = vmatmul.mubr.bf16.gmra.mxu0 %v836
        %v889 = vpop.f32.mrf.mxu0
        %v890 = vadd.f32 %v814, %v889
        %v891 = vpop.f32.mrf.mxu0
        %v892 = vadd.f32 %v814, %v891
        %v893 = vpop.f32.mrf.mxu0
        %v894 = vadd.f32 %v819, %v893
        %v895 = vpop.f32.mrf.mxu0
        %v896 = vadd.f32 %v819, %v895
        %897 = vdwg.mxu0
        %v898 = vmax.f32 %v880, 0.0
        %v899 = vmax.f32 %v882, 0.0
        %v900 = vmax.f32 %v884, 0.0
        %v901 = vmax.f32 %v886, 0.0
        %v902 = vmax.f32 %v890, 0.0
        %v903 = vmax.f32 %v892, 0.0
        %v904 = vmax.f32 %v894, 0.0
        %v905 = vmax.f32 %v896, 0.0
        %v906 = vpack.c.bf16 %v900, %v898
        %v907 = vpack.c.bf16 %v901, %v899
        %v908 = vpack.c.bf16 %v904, %v902
        %v909 = vpack.c.bf16 %v905, %v903
        %v910 = vld [vmem:[#allocation8] sm:$0xff]
        %v911 = vld [vmem:[#allocation8 + $0x8] sm:$0xff]
        %v912 = vld [vmem:[#allocation8 + $0x10] sm:$0xff]
        %v913 = vld [vmem:[#allocation8 + $0x18] sm:$0xff]
        %v914 = vld [vmem:[#allocation9] sm:$0xff]
        %v915 = vld [vmem:[#allocation9 + $0x8] sm:$0xff]
        %v916 = vld [vmem:[#allocation9 + $0x10] sm:$0xff]
        %v917 = vld [vmem:[#allocation9 + $0x18] sm:$0xff]
        %919 = vset.pattern.permute.xlu0 0
        %920 = vperm.xlu0 %919, %v914
        %v921 = vpop.permute.xlu0 %920
        %924 = vset.pattern.permute.xlu0 0
        %925 = vperm.xlu0 %924, %v915
        %v926 = vpop.permute.xlu0 %925
        %929 = vset.pattern.permute.xlu0 0
        %930 = vperm.xlu0 %929, %v916
        %v931 = vpop.permute.xlu0 %930
        %934 = vset.pattern.permute.xlu0 0
        %935 = vperm.xlu0 %934, %v917
        %v936 = vpop.permute.xlu0 %935
        %vm938 = vcmask 64512
        %v940 = vsel %vm938, %v910, 0
        %v943 = vsel %vm938, %v911, 0
        %v946 = vsel %vm938, %v912, 0
        %v949 = vsel %vm938, %v913, 0
        %951 = vmatprep.subr.mxu0 0.0
        %952 = vmatpush1.msra.mxu0 0.0
        %953 = vmatprep.subr.mxu0 0.0
        %954 = vmatpush1.msra.mxu0 0.0
        %955 = vmatprep.subr.mxu0 0.0
        %956 = vmatpush1.msra.mxu0 0.0
        %957 = vmatprep.subr.mxu0 0.0
        %958 = vmatpush1.msra.mxu0 0.0
        %959 = vmatprep.subr.mxu0 0.0
        %960 = vmatpush1.msra.mxu0 0.0
        %961 = vmatprep.subr.mxu0 0.0
        %962 = vmatpush1.msra.mxu0 0.0
        %963 = vmatprep.subr.mxu0 0.0
        %964 = vmatpush1.msra.mxu0 0.0
        %965 = vmatprep.subr.mxu0 0.0
        %966 = vmatpush1.msra.mxu0 0.0
        %967 = vmatprep.subr.mxu0 0.0
        %968 = vmatpush1.msra.mxu0 0.0
        %969 = vmatprep.subr.mxu0 0.0
        %970 = vmatpush1.msra.mxu0 0.0
        %971 = vmatprep.subr.mxu0 0.0
        %972 = vmatpush1.msra.mxu0 0.0
        %973 = vmatprep.subr.mxu0 0.0
        %974 = vmatpush1.msra.mxu0 0.0
        %975 = vmatprep.subr.mxu0 0.0
        %976 = vmatpush1.msra.mxu0 0.0
        %977 = vmatprep.subr.mxu0 0.0
        %978 = vmatpush1.msra.mxu0 0.0
        %979 = vmatprep.subr.mxu0 0.0
        %980 = vmatpush1.msra.mxu0 0.0
        %981 = vmatprep.subr.mxu0 %v641
        %982 = vmatpush1.msra.mxu0 %v640
        %983 = vmatprep.subr.mxu0 0.0
        %984 = vmatpush2.msra.mxu0 0.0
        %985 = vmatprep.subr.mxu0 0.0
        %986 = vmatpush2.msra.mxu0 0.0
        %987 = vmatprep.subr.mxu0 0.0
        %988 = vmatpush2.msra.mxu0 0.0
        %989 = vmatprep.subr.mxu0 0.0
        %990 = vmatpush2.msra.mxu0 0.0
        %991 = vmatprep.subr.mxu0 0.0
        %992 = vmatpush2.msra.mxu0 0.0
        %993 = vmatprep.subr.mxu0 0.0
        %994 = vmatpush2.msra.mxu0 0.0
        %995 = vmatprep.subr.mxu0 0.0
        %996 = vmatpush2.msra.mxu0 0.0
        %997 = vmatprep.subr.mxu0 0.0
        %998 = vmatpush2.msra.mxu0 0.0
        %999 = vmatprep.subr.mxu0 0.0
        %1000 = vmatpush2.msra.mxu0 0.0
        %1001 = vmatprep.subr.mxu0 0.0
        %1002 = vmatpush2.msra.mxu0 0.0
        %1003 = vmatprep.subr.mxu0 0.0
        %1004 = vmatpush2.msra.mxu0 0.0
        %1005 = vmatprep.subr.mxu0 0.0
        %1006 = vmatpush2.msra.mxu0 0.0
        %1007 = vmatprep.subr.mxu0 0.0
        %1008 = vmatpush2.msra.mxu0 0.0
        %1009 = vmatprep.subr.mxu0 0.0
        %1010 = vmatpush2.msra.mxu0 0.0
        %1011 = vmatprep.subr.mxu0 0.0
        %1012 = vmatpush2.msra.mxu0 0.0
        %1013 = vmatprep.subr.mxu0 0.0
        %1014 = vmatpush2.msra.mxu0 0.0
        %1015 = vmatprep.mubr.f32.mxu0 0.0
        %1016 = vmatmul.mubr.f32.gmra.mxu0 %v940
        %v1017 = vpop.f32.mrf.mxu0
        %v1018 = vadd.f32 %v921, %v1017
        %v1019 = vpop.f32.mrf.mxu0
        %v1020 = vadd.f32 %v921, %v1019
        %1021 = vmatprep.mubr.f32.mxu0 0.0
        %1022 = vmatmul.mubr.f32.gmra.mxu0 %v943
        %v1023 = vpop.f32.mrf.mxu0
        %v1024 = vadd.f32 %v926, %v1023
        %v1025 = vpop.f32.mrf.mxu0
        %v1026 = vadd.f32 %v926, %v1025
        %1027 = vmatprep.mubr.f32.mxu0 0.0
        %1028 = vmatmul.mubr.f32.gmra.mxu0 %v946
        %v1029 = vpop.f32.mrf.mxu0
        %v1030 = vadd.f32 %v931, %v1029
        %v1031 = vpop.f32.mrf.mxu0
        %v1032 = vadd.f32 %v931, %v1031
        %1033 = vmatprep.mubr.f32.mxu0 0.0
        %1034 = vmatmul.mubr.f32.gmra.mxu0 %v949
        %v1035 = vpop.f32.mrf.mxu0
        %v1036 = vadd.f32 %v936, %v1035
        %v1037 = vpop.f32.mrf.mxu0
        %v1038 = vadd.f32 %v936, %v1037
        %1039 = vdwg.mxu0
        %v1040 = vmax.f32 %v1018, 0.0
        %v1041 = vmax.f32 %v1020, 0.0
        %v1042 = vmax.f32 %v1024, 0.0
        %v1043 = vmax.f32 %v1026, 0.0
        %v1044 = vmax.f32 %v1030, 0.0
        %v1045 = vmax.f32 %v1032, 0.0
        %v1046 = vmax.f32 %v1036, 0.0
        %v1047 = vmax.f32 %v1038, 0.0
        %1048 = vmatprep.subr.mxu0 0.0
        %1049 = vmatpush1.xpose.msra.mxu0 0.0
        %1050 = vmatprep.subr.mxu0 0.0
        %1051 = vmatpush1.xpose.msra.mxu0 0.0
        %1052 = vmatprep.subr.mxu0 0.0
        %1053 = vmatpush1.xpose.msra.mxu0 0.0
        %1054 = vmatprep.subr.mxu0 0.0
        %1055 = vmatpush1.xpose.msra.mxu0 0.0
        %1056 = vmatprep.subr.mxu0 0.0
        %1057 = vmatpush1.xpose.msra.mxu0 0.0
        %1058 = vmatprep.subr.mxu0 0.0
        %1059 = vmatpush1.xpose.msra.mxu0 0.0
        %1060 = vmatprep.subr.mxu0 0.0
        %1061 = vmatpush1.xpose.msra.mxu0 0.0
        %1062 = vmatprep.subr.mxu0 0.0
        %1063 = vmatpush1.xpose.msra.mxu0 0.0
        %1064 = vmatprep.subr.mxu0 0.0
        %1065 = vmatpush1.xpose.msra.mxu0 0.0
        %1066 = vmatprep.subr.mxu0 0.0
        %1067 = vmatpush1.xpose.msra.mxu0 0.0
        %1068 = vmatprep.subr.mxu0 0.0
        %1069 = vmatpush1.xpose.msra.mxu0 0.0
        %1070 = vmatprep.subr.mxu0 0.0
        %1071 = vmatpush1.xpose.msra.mxu0 0.0
        %1072 = vmatprep.subr.mxu0 %v905
        %1073 = vmatpush1.xpose.msra.mxu0 %v904
        %1074 = vmatprep.subr.mxu0 %v903
        %1075 = vmatpush1.xpose.msra.mxu0 %v902
        %1076 = vmatprep.subr.mxu0 %v901
        %1077 = vmatpush1.xpose.msra.mxu0 %v900
        %1078 = vmatprep.subr.mxu0 %v899
        %1079 = vmatpush1.xpose.msra.mxu0 %v898
        %1080 = vmatprep.subr.mxu0 0.0
        %1081 = vmatpush2.xpose.msra.mxu0 0.0
        %1082 = vmatprep.subr.mxu0 0.0
        %1083 = vmatpush2.xpose.msra.mxu0 0.0
        %1084 = vmatprep.subr.mxu0 0.0
        %1085 = vmatpush2.xpose.msra.mxu0 0.0
        %1086 = vmatprep.subr.mxu0 0.0
        %1087 = vmatpush2.xpose.msra.mxu0 0.0
        %1088 = vmatprep.subr.mxu0 0.0
        %1089 = vmatpush2.xpose.msra.mxu0 0.0
        %1090 = vmatprep.subr.mxu0 0.0
        %1091 = vmatpush2.xpose.msra.mxu0 0.0
        %1092 = vmatprep.subr.mxu0 0.0
        %1093 = vmatpush2.xpose.msra.mxu0 0.0
        %1094 = vmatprep.subr.mxu0 0.0
        %1095 = vmatpush2.xpose.msra.mxu0 0.0
        %1096 = vmatprep.subr.mxu0 0.0
        %1097 = vmatpush2.xpose.msra.mxu0 0.0
        %1098 = vmatprep.subr.mxu0 0.0
        %1099 = vmatpush2.xpose.msra.mxu0 0.0
        %1100 = vmatprep.subr.mxu0 0.0
        %1101 = vmatpush2.xpose.msra.mxu0 0.0
        %1102 = vmatprep.subr.mxu0 0.0
        %1103 = vmatpush2.xpose.msra.mxu0 0.0
        %1104 = vmatprep.subr.mxu0 0.0
        %1105 = vmatpush2.xpose.msra.mxu0 0.0
        %1106 = vmatprep.subr.mxu0 0.0
        %1107 = vmatpush2.xpose.msra.mxu0 0.0
        %1108 = vmatprep.subr.mxu0 0.0
        %1109 = vmatpush2.xpose.msra.mxu0 0.0
        %1110 = vmatprep.subr.mxu0 0.0
        %1111 = vmatpush2.xpose.msra.mxu0 0.0
        %1112 = vmatprep.mubr.f32.mxu0 %v1041
        %1113 = vmatmul.mubr.f32.gmra.mxu0 %v1040
        %v1114 = vpop.f32.mrf.mxu0
        %v1115 = vadd.f32 0.0, %v1114
        %v1116 = vpop.f32.mrf.mxu0
        %1117 = vmatprep.mubr.f32.mxu0 %v1043
        %1118 = vmatmul.mubr.f32.gmra.mxu0 %v1042
        %v1119 = vpop.f32.mrf.mxu0
        %v1120 = vadd.f32 0.0, %v1119
        %v1121 = vpop.f32.mrf.mxu0
        %1122 = vmatprep.mubr.f32.mxu0 %v1045
        %1123 = vmatmul.mubr.f32.gmra.mxu0 %v1044
        %v1124 = vpop.f32.mrf.mxu0
        %v1125 = vadd.f32 0.0, %v1124
        %v1126 = vpop.f32.mrf.mxu0
        %1127 = vmatprep.mubr.f32.mxu0 %v1047
        %1128 = vmatmul.mubr.f32.gmra.mxu0 %v1046
        %v1129 = vpop.f32.mrf.mxu0
        %v1130 = vadd.f32 0.0, %v1129
        %v1131 = vpop.f32.mrf.mxu0
        %1132 = vdwg.mxu0
        %v1133 = vld [vmem:[#allocation11] sm:$0xff]
        %v1134 = vld [vmem:[#allocation11 + $0x8] sm:$0xff]
        %v1135 = vld [vmem:[#allocation11 + $0x10] sm:$0xff]
        %v1136 = vld [vmem:[#allocation11 + $0x18] sm:$0xff]
        %v1137 = vld [vmem:[#allocation12] sm:$0xff]
        %v1138 = vld [vmem:[#allocation12 + $0x8] sm:$0xff]
        %v1139 = vld [vmem:[#allocation12 + $0x10] sm:$0xff]
        %v1140 = vld [vmem:[#allocation12 + $0x18] sm:$0xff]
        %1142 = vset.pattern.permute.xlu0 0
        %1143 = vperm.xlu0 %1142, %v1137
        %v1144 = vpop.permute.xlu0 %1143
        %1147 = vset.pattern.permute.xlu0 0
        %1148 = vperm.xlu0 %1147, %v1138
        %v1149 = vpop.permute.xlu0 %1148
        %1152 = vset.pattern.permute.xlu0 0
        %1153 = vperm.xlu0 %1152, %v1139
        %v1154 = vpop.permute.xlu0 %1153
        %1157 = vset.pattern.permute.xlu0 0
        %1158 = vperm.xlu0 %1157, %v1140
        %v1159 = vpop.permute.xlu0 %1158
        %vm1161 = vcmask 261120
        %v1163 = vsel %vm1161, %v1133, 0
        %v1166 = vsel %vm1161, %v1134, 0
        %v1169 = vsel %vm1161, %v1135, 0
        %v1172 = vsel %vm1161, %v1136, 0
        %1174 = vmatprep.subr.mxu0 0.0
        %1175 = vmatpush1.msra.mxu0 0.0
        %1176 = vmatprep.subr.mxu0 0.0
        %1177 = vmatpush1.msra.mxu0 0.0
        %1178 = vmatprep.subr.mxu0 0.0
        %1179 = vmatpush1.msra.mxu0 0.0
        %1180 = vmatprep.subr.mxu0 0.0
        %1181 = vmatpush1.msra.mxu0 0.0
        %1182 = vmatprep.subr.mxu0 0.0
        %1183 = vmatpush1.msra.mxu0 0.0
        %1184 = vmatprep.subr.mxu0 0.0
        %1185 = vmatpush1.msra.mxu0 0.0
        %1186 = vmatprep.subr.mxu0 0.0
        %1187 = vmatpush1.msra.mxu0 0.0
        %1188 = vmatprep.subr.mxu0 0.0
        %1189 = vmatpush1.msra.mxu0 0.0
        %1190 = vmatprep.subr.mxu0 0.0
        %1191 = vmatpush1.msra.mxu0 0.0
        %1192 = vmatprep.subr.mxu0 0.0
        %1193 = vmatpush1.msra.mxu0 0.0
        %1194 = vmatprep.subr.mxu0 0.0
        %1195 = vmatpush1.msra.mxu0 0.0
        %1196 = vmatprep.subr.mxu0 0.0
        %1197 = vmatpush1.msra.mxu0 0.0
        %1198 = vmatprep.subr.mxu0 0.0
        %1199 = vmatpush1.msra.mxu0 %v1130
        %1200 = vmatprep.subr.mxu0 0.0
        %1201 = vmatpush1.msra.mxu0 %v1125
        %1202 = vmatprep.subr.mxu0 0.0
        %1203 = vmatpush1.msra.mxu0 %v1120
        %1204 = vmatprep.subr.mxu0 0.0
        %1205 = vmatpush1.msra.mxu0 %v1115
        %1206 = vmatprep.subr.mxu0 0.0
        %1207 = vmatpush2.msra.mxu0 0.0
        %1208 = vmatprep.subr.mxu0 0.0
        %1209 = vmatpush2.msra.mxu0 0.0
        %1210 = vmatprep.subr.mxu0 0.0
        %1211 = vmatpush2.msra.mxu0 0.0
        %1212 = vmatprep.subr.mxu0 0.0
        %1213 = vmatpush2.msra.mxu0 0.0
        %1214 = vmatprep.subr.mxu0 0.0
        %1215 = vmatpush2.msra.mxu0 0.0
        %1216 = vmatprep.subr.mxu0 0.0
        %1217 = vmatpush2.msra.mxu0 0.0
        %1218 = vmatprep.subr.mxu0 0.0
        %1219 = vmatpush2.msra.mxu0 0.0
        %1220 = vmatprep.subr.mxu0 0.0
        %1221 = vmatpush2.msra.mxu0 0.0
        %1222 = vmatprep.subr.mxu0 0.0
        %1223 = vmatpush2.msra.mxu0 0.0
        %1224 = vmatprep.subr.mxu0 0.0
        %1225 = vmatpush2.msra.mxu0 0.0
        %1226 = vmatprep.subr.mxu0 0.0
        %1227 = vmatpush2.msra.mxu0 0.0
        %1228 = vmatprep.subr.mxu0 0.0
        %1229 = vmatpush2.msra.mxu0 0.0
        %1230 = vmatprep.subr.mxu0 0.0
        %1231 = vmatpush2.msra.mxu0 0.0
        %1232 = vmatprep.subr.mxu0 0.0
        %1233 = vmatpush2.msra.mxu0 0.0
        %1234 = vmatprep.subr.mxu0 0.0
        %1235 = vmatpush2.msra.mxu0 0.0
        %1236 = vmatprep.subr.mxu0 0.0
        %1237 = vmatpush2.msra.mxu0 0.0
        %1238 = vmatprep.mubr.f32.mxu0 0.0
        %1239 = vmatmul.mubr.f32.gmra.mxu0 %v1163
        %v1240 = vpop.f32.mrf.mxu0
        %v1241 = vadd.f32 %v1144, %v1240
        %v1242 = vpop.f32.mrf.mxu0
        %1243 = vmatprep.mubr.f32.mxu0 0.0
        %1244 = vmatmul.mubr.f32.gmra.mxu0 %v1166
        %v1245 = vpop.f32.mrf.mxu0
        %v1246 = vadd.f32 %v1149, %v1245
        %v1247 = vpop.f32.mrf.mxu0
        %1248 = vmatprep.mubr.f32.mxu0 0.0
        %1249 = vmatmul.mubr.f32.gmra.mxu0 %v1169
        %v1250 = vpop.f32.mrf.mxu0
        %v1251 = vadd.f32 %v1154, %v1250
        %v1252 = vpop.f32.mrf.mxu0
        %1253 = vmatprep.mubr.f32.mxu0 0.0
        %1254 = vmatmul.mubr.f32.gmra.mxu0 %v1172
        %v1255 = vpop.f32.mrf.mxu0
        %v1256 = vadd.f32 %v1159, %v1255
        %v1257 = vpop.f32.mrf.mxu0
        %1258 = vdwg.mxu0
        %v1259 = vmax.f32 %v1241, 0.0
        %v1260 = vmax.f32 %v1246, 0.0
        %v1261 = vmax.f32 %v1251, 0.0
        %v1262 = vmax.f32 %v1256, 0.0
        %v1263 = vsel %vm1161, %v1259, -inf
        %1264 = vmax.xlane.f32.xlu0 %v1263
        %v1265 = vpop.xlane.xlu0 %1264
        %v1266 = vsel %vm1161, %v1260, -inf
        %1267 = vmax.xlane.f32.xlu0 %v1266
        %v1268 = vpop.xlane.xlu0 %1267
        %v1269 = vsel %vm1161, %v1261, -inf
        %1270 = vmax.xlane.f32.xlu0 %v1269
        %v1271 = vpop.xlane.xlu0 %1270
        %v1272 = vsel %vm1161, %v1262, -inf
        %1273 = vmax.xlane.f32.xlu0 %v1272
        %v1274 = vpop.xlane.xlu0 %1273
        %v1275 = vsub.f32 %v1259, %v1265
        %v1276 = vsub.f32 %v1260, %v1268
        %v1277 = vsub.f32 %v1261, %v1271
        %v1278 = vsub.f32 %v1262, %v1274
        %v1279 = vmul.f32 %v1275, 1.442695
        %v1280 = vpow.pop %v1279
        %v1281 = vmul.f32 %v1276, 1.442695
        %v1282 = vpow.pop %v1281
        %v1283 = vmul.f32 %v1277, 1.442695
        %v1284 = vpow.pop %v1283
        %v1285 = vmul.f32 %v1278, 1.442695
        %v1286 = vpow.pop %v1285
        %v1287 = vsel %vm1161, %v1280, 0.0
        %1288 = vadd.xlane.f32.xlu0 %v1287
        %v1289 = vpop.xlane.xlu0 %1288
        %v1290 = vsel %vm1161, %v1282, 0.0
        %1291 = vadd.xlane.f32.xlu0 %v1290
        %v1292 = vpop.xlane.xlu0 %1291
        %v1293 = vsel %vm1161, %v1284, 0.0
        %1294 = vadd.xlane.f32.xlu0 %v1293
        %v1295 = vpop.xlane.xlu0 %1294
        %v1296 = vsel %vm1161, %v1286, 0.0
        %1297 = vadd.xlane.f32.xlu0 %v1296
        %v1298 = vpop.xlane.xlu0 %1297
        %v1299 = vrcp.pop %v1289
        %v1300 = vrcp.pop %v1292
        %v1301 = vrcp.pop %v1295
        %v1302 = vrcp.pop %v1298
        %v1303 = vmul.f32 %v1280, %v1299
        %v1304 = vmul.f32 %v1282, %v1300
        %v1305 = vmul.f32 %v1284, %v1301
        %v1306 = vmul.f32 %v1286, %v1302
        %v1307 = vld [vmem:[%s10] sm:$0x1]
        %v1308 = vstv %s644
        %v1309 = vmul.f32 %v1307, %v1308
        %v1310 = vld [vmem:[%s11] sm:$0x1]
        %v1311 = vadd.f32 %v1309, %v1310
        %v1312 = vmax.f32 %v1311, 0.0
        %v1314 = vsel %vm1161, %v1312, 0
        %1316 = vmatprep.subr.mxu0 0.0
        %1317 = vmatpush1.msra.mxu0 0.0
        %1318 = vmatprep.subr.mxu0 0.0
        %1319 = vmatpush1.msra.mxu0 0.0
        %1320 = vmatprep.subr.mxu0 0.0
        %1321 = vmatpush1.msra.mxu0 0.0
        %1322 = vmatprep.subr.mxu0 0.0
        %1323 = vmatpush1.msra.mxu0 0.0
        %1324 = vmatprep.subr.mxu0 0.0
        %1325 = vmatpush1.msra.mxu0 0.0
        %1326 = vmatprep.subr.mxu0 0.0
        %1327 = vmatpush1.msra.mxu0 0.0
        %1328 = vmatprep.subr.mxu0 0.0
        %1329 = vmatpush1.msra.mxu0 0.0
        %1330 = vmatprep.subr.mxu0 0.0
        %1331 = vmatpush1.msra.mxu0 0.0
        %1332 = vmatprep.subr.mxu0 0.0
        %1333 = vmatpush1.msra.mxu0 0.0
        %1334 = vmatprep.subr.mxu0 0.0
        %1335 = vmatpush1.msra.mxu0 0.0
        %1336 = vmatprep.subr.mxu0 0.0
        %1337 = vmatpush1.msra.mxu0 0.0
        %1338 = vmatprep.subr.mxu0 0.0
        %1339 = vmatpush1.msra.mxu0 0.0
        %1340 = vmatprep.subr.mxu0 %v905
        %1341 = vmatpush1.msra.mxu0 %v904
        %1342 = vmatprep.subr.mxu0 %v903
        %1343 = vmatpush1.msra.mxu0 %v902
        %1344 = vmatprep.subr.mxu0 %v901
        %1345 = vmatpush1.msra.mxu0 %v900
        %1346 = vmatprep.subr.mxu0 %v899
        %1347 = vmatpush1.msra.mxu0 %v898
        %1348 = vmatprep.subr.mxu0 0.0
        %1349 = vmatpush2.msra.mxu0 0.0
        %1350 = vmatprep.subr.mxu0 0.0
        %1351 = vmatpush2.msra.mxu0 0.0
        %1352 = vmatprep.subr.mxu0 0.0
        %1353 = vmatpush2.msra.mxu0 0.0
        %1354 = vmatprep.subr.mxu0 0.0
        %1355 = vmatpush2.msra.mxu0 0.0
        %1356 = vmatprep.subr.mxu0 0.0
        %1357 = vmatpush2.msra.mxu0 0.0
        %1358 = vmatprep.subr.mxu0 0.0
        %1359 = vmatpush2.msra.mxu0 0.0
        %1360 = vmatprep.subr.mxu0 0.0
        %1361 = vmatpush2.msra.mxu0 0.0
        %1362 = vmatprep.subr.mxu0 0.0
        %1363 = vmatpush2.msra.mxu0 0.0
        %1364 = vmatprep.subr.mxu0 0.0
        %1365 = vmatpush2.msra.mxu0 0.0
        %1366 = vmatprep.subr.mxu0 0.0
        %1367 = vmatpush2.msra.mxu0 0.0
        %1368 = vmatprep.subr.mxu0 0.0
        %1369 = vmatpush2.msra.mxu0 0.0
        %1370 = vmatprep.subr.mxu0 0.0
        %1371 = vmatpush2.msra.mxu0 0.0
        %1372 = vmatprep.subr.mxu0 0.0
        %1373 = vmatpush2.msra.mxu0 0.0
        %1374 = vmatprep.subr.mxu0 0.0
        %1375 = vmatpush2.msra.mxu0 0.0
        %1376 = vmatprep.subr.mxu0 0.0
        %1377 = vmatpush2.msra.mxu0 0.0
        %1378 = vmatprep.subr.mxu0 0.0
        %1379 = vmatpush2.msra.mxu0 0.0
        %1380 = vmatprep.mubr.f32.mxu0 0.0
        %1381 = vmatmul.mubr.f32.gmra.mxu0 %v1314
        %v1382 = vpop.f32.mrf.mxu0
        %v1383 = vadd.f32 0.0, %v1382
        %v1384 = vpop.f32.mrf.mxu0
        %v1385 = vadd.f32 0.0, %v1384
        %1386 = vdwg.mxu0
        %v1387 = vld [vmem:[%s12] sm:$0xff]
        %v1388 = vld [vmem:[%s12 + $0x8] sm:$0xff]
        %v1389 = vld [vmem:[%s12 + $0x10] sm:$0xff]
        %v1390 = vld [vmem:[%s12 + $0x18] sm:$0xff]
        %1392 = vset.pattern.permute.xlu0 0
        %1393 = vperm.xlu0 %1392, %v1387
        %v1394 = vpop.permute.xlu0 %1393
        %1397 = vset.pattern.permute.xlu0 0
        %1398 = vperm.xlu0 %1397, %v1388
        %v1399 = vpop.permute.xlu0 %1398
        %1402 = vset.pattern.permute.xlu0 0
        %1403 = vperm.xlu0 %1402, %v1389
        %v1404 = vpop.permute.xlu0 %1403
        %1407 = vset.pattern.permute.xlu0 0
        %1408 = vperm.xlu0 %1407, %v1390
        %v1409 = vpop.permute.xlu0 %1408
        %v1411 = vlaneseq
        %v1412 = vshrl.u32 %v1411, 7
        %v1413 = vsub.s32 0, %v1412
        %v1414 = vrot.slane %v1383, %v1413
        %v1415 = vlaneseq
        %v1416 = vshrl.u32 %v1415, 7
        %v1417 = vsub.s32 0, %v1416
        %v1418 = vrot.slane %v1385, %v1417
        %v1419 = vmul.f32 %v1394, %v1414
        %v1420 = vmul.f32 %v1394, %v1418
        %v1421 = vmul.f32 %v1399, %v1414
        %v1422 = vmul.f32 %v1399, %v1418
        %v1423 = vmul.f32 %v1404, %v1414
        %v1424 = vmul.f32 %v1404, %v1418
        %v1425 = vmul.f32 %v1409, %v1414
        %v1426 = vmul.f32 %v1409, %v1418
        %v1427 = vld [vmem:[%s13] sm:$0xff]
        %v1428 = vld [vmem:[%s13 + $0x8] sm:$0xff]
        %v1429 = vld [vmem:[%s13 + $0x10] sm:$0xff]
        %v1430 = vld [vmem:[%s13 + $0x18] sm:$0xff]
        %1432 = vset.pattern.permute.xlu0 0
        %1433 = vperm.xlu0 %1432, %v1427
        %v1434 = vpop.permute.xlu0 %1433
        %1437 = vset.pattern.permute.xlu0 0
        %1438 = vperm.xlu0 %1437, %v1428
        %v1439 = vpop.permute.xlu0 %1438
        %1442 = vset.pattern.permute.xlu0 0
        %1443 = vperm.xlu0 %1442, %v1429
        %v1444 = vpop.permute.xlu0 %1443
        %1447 = vset.pattern.permute.xlu0 0
        %1448 = vperm.xlu0 %1447, %v1430
        %v1449 = vpop.permute.xlu0 %1448
        %v1451 = vadd.f32 %v1419, %v1434
        %v1452 = vadd.f32 %v1420, %v1434
        %v1453 = vadd.f32 %v1421, %v1439
        %v1454 = vadd.f32 %v1422, %v1439
        %v1455 = vadd.f32 %v1423, %v1444
        %v1456 = vadd.f32 %v1424, %v1444
        %v1457 = vadd.f32 %v1425, %v1449
        %v1458 = vadd.f32 %v1426, %v1449
        %v1459 = vmax.f32 %v1451, 0.0
        %v1460 = vmax.f32 %v1452, 0.0
        %v1461 = vmax.f32 %v1453, 0.0
        %v1462 = vmax.f32 %v1454, 0.0
        %v1463 = vmax.f32 %v1455, 0.0
        %v1464 = vmax.f32 %v1456, 0.0
        %v1465 = vmax.f32 %v1457, 0.0
        %v1466 = vmax.f32 %v1458, 0.0
        %v1467 = vpack.c.bf16 %v1304, %v1303
        %v1468 = vpack.c.bf16 %v1306, %v1305
        %v1469 = vpack.c.bf16 %v1461, %v1459
        %v1470 = vpack.c.bf16 %v1462, %v1460
        %v1471 = vpack.c.bf16 %v1465, %v1463
        %v1472 = vpack.c.bf16 %v1466, %v1464
        %v1474 = vsel %vm1161, %v1467, 0
        %v1477 = vsel %vm1161, %v1468, 0
        %1479 = vmatprep.subr.bf16.mxu0 0
        %1480 = vmatpush1.bf16.msra.mxu0 0
        %1481 = vmatprep.subr.bf16.mxu0 0
        %1482 = vmatpush1.bf16.msra.mxu0 0
        %1483 = vmatprep.subr.bf16.mxu0 0
        %1484 = vmatpush1.bf16.msra.mxu0 0
        %1485 = vmatprep.subr.bf16.mxu0 0
        %1486 = vmatpush1.bf16.msra.mxu0 0
        %1487 = vmatprep.subr.bf16.mxu0 0
        %1488 = vmatpush1.bf16.msra.mxu0 0
        %1489 = vmatprep.subr.bf16.mxu0 0
        %1490 = vmatpush1.bf16.msra.mxu0 0
        %1491 = vmatprep.subr.bf16.mxu0 %v1472
        %1492 = vmatpush1.bf16.msra.mxu0 %v1471
        %1493 = vmatprep.subr.bf16.mxu0 %v1470
        %1494 = vmatpush1.bf16.msra.mxu0 %v1469
        %1495 = vmatprep.subr.bf16.mxu0 0
        %1496 = vmatpush2.bf16.msra.mxu0 0
        %1497 = vmatprep.subr.bf16.mxu0 0
        %1498 = vmatpush2.bf16.msra.mxu0 0
        %1499 = vmatprep.subr.bf16.mxu0 0
        %1500 = vmatpush2.bf16.msra.mxu0 0
        %1501 = vmatprep.subr.bf16.mxu0 0
        %1502 = vmatpush2.bf16.msra.mxu0 0
        %1503 = vmatprep.subr.bf16.mxu0 0
        %1504 = vmatpush2.bf16.msra.mxu0 0
        %1505 = vmatprep.subr.bf16.mxu0 0
        %1506 = vmatpush2.bf16.msra.mxu0 0
        %1507 = vmatprep.subr.bf16.mxu0 0
        %1508 = vmatpush2.bf16.msra.mxu0 0
        %1509 = vmatprep.subr.bf16.mxu0 0
        %1510 = vmatpush2.bf16.msra.mxu0 0
        %1511 = vmatprep.mubr.bf16.mxu0 0
        %1512 = vmatmul.mubr.bf16.gmra.mxu0 %v1474
        %v1513 = vpop.f32.mrf.mxu0
        %v1514 = vadd.f32 0.0, %v1513
        %v1515 = vpop.f32.mrf.mxu0
        %v1516 = vadd.f32 0.0, %v1515
        %v1517 = vpop.f32.mrf.mxu0
        %v1518 = vadd.f32 0.0, %v1517
        %v1519 = vpop.f32.mrf.mxu0
        %v1520 = vadd.f32 0.0, %v1519
        %1521 = vmatprep.mubr.bf16.mxu0 0
        %1522 = vmatmul.mubr.bf16.gmra.mxu0 %v1477
        %v1523 = vpop.f32.mrf.mxu0
        %v1524 = vadd.f32 0.0, %v1523
        %v1525 = vpop.f32.mrf.mxu0
        %v1526 = vadd.f32 0.0, %v1525
        %v1527 = vpop.f32.mrf.mxu0
        %v1528 = vadd.f32 0.0, %v1527
        %v1529 = vpop.f32.mrf.mxu0
        %v1530 = vadd.f32 0.0, %v1529
        %1531 = vdwg.mxu0
        %v1532 = vld [vmem:[%s14] sm:$0xf]
        %v1533 = vld [vmem:[%s14 + $0x4] sm:$0xf]
        %v1534 = vld [vmem:[%s14 + $0x8] sm:$0xf]
        %v1535 = vld [vmem:[%s14 + $0xc] sm:$0xf]
        %v1536 = vld [vmem:[%s14 + $0x10] sm:$0xf]
        %v1537 = vld [vmem:[%s14 + $0x14] sm:$0xf]
        %v1538 = vld [vmem:[%s14 + $0x18] sm:$0xf]
        %v1539 = vld [vmem:[%s14 + $0x1c] sm:$0xf]
        %v1540 = vld [vmem:[%s14 + $0x20] sm:$0xf]
        %v1541 = vld [vmem:[%s14 + $0x24] sm:$0xf]
        %v1542 = vld [vmem:[%s14 + $0x28] sm:$0xf]
        %v1543 = vld [vmem:[%s14 + $0x2c] sm:$0xf]
        %v1544 = vld [vmem:[%s14 + $0x30] sm:$0xf]
        %v1545 = vld [vmem:[%s14 + $0x34] sm:$0xf]
        %v1546 = vld [vmem:[%s14 + $0x38] sm:$0xf]
        %v1547 = vld [vmem:[%s14 + $0x3c] sm:$0xf]
        %v1548 = vld [vmem:[%s14 + $0x40] sm:$0xf]
        %v1549 = vld [vmem:[%s14 + $0x44] sm:$0xf]
        %v1550 = vld [vmem:[%s14 + $0x48] sm:$0xf]
        %v1551 = vld [vmem:[%s14 + $0x4c] sm:$0xf]
        %v1552 = vld [vmem:[%s14 + $0x50] sm:$0xf]
        %v1553 = vld [vmem:[%s14 + $0x54] sm:$0xf]
        %v1554 = vld [vmem:[%s14 + $0x58] sm:$0xf]
        %v1555 = vld [vmem:[%s14 + $0x5c] sm:$0xf]
        %v1556 = vld [vmem:[%s14 + $0x60] sm:$0xf]
        %v1557 = vld [vmem:[%s14 + $0x64] sm:$0xf]
        %v1558 = vld [vmem:[%s14 + $0x68] sm:$0xf]
        %v1559 = vld [vmem:[%s14 + $0x6c] sm:$0xf]
        %v1560 = vld [vmem:[%s14 + $0x70] sm:$0xf]
        %v1561 = vld [vmem:[%s14 + $0x74] sm:$0xf]
        %v1562 = vld [vmem:[%s14 + $0x78] sm:$0xf]
        %v1563 = vld [vmem:[%s14 + $0x7c] sm:$0xf]
        %v1564 = vld [vmem:[%s14 + $0x80] sm:$0xf]
        %v1565 = vld [vmem:[%s14 + $0x84] sm:$0xf]
        %v1566 = vld [vmem:[%s14 + $0x88] sm:$0xf]
        %v1567 = vld [vmem:[%s14 + $0x8c] sm:$0xf]
        %v1568 = vld [vmem:[%s15] sm:$0xf]
        %v1569 = vld [vmem:[%s15 + $0x4] sm:$0xf]
        %v1570 = vld [vmem:[%s15 + $0x8] sm:$0xf]
        %v1571 = vld [vmem:[%s15 + $0xc] sm:$0xf]
        %v1572 = vld [vmem:[%s15 + $0x10] sm:$0xf]
        %v1573 = vld [vmem:[%s15 + $0x14] sm:$0xf]
        %v1574 = vld [vmem:[%s15 + $0x18] sm:$0xf]
        %v1575 = vld [vmem:[%s15 + $0x1c] sm:$0xf]
        %v1576 = vld [vmem:[%s15 + $0x20] sm:$0xf]
        %v1577 = vld [vmem:[%s15 + $0x24] sm:$0xf]
        %v1578 = vld [vmem:[%s15 + $0x28] sm:$0xf]
        %v1579 = vld [vmem:[%s15 + $0x2c] sm:$0xf]
        %v1580 = vld [vmem:[%s15 + $0x30] sm:$0xf]
        %v1581 = vld [vmem:[%s15 + $0x34] sm:$0xf]
        %v1582 = vld [vmem:[%s15 + $0x38] sm:$0xf]
        %v1583 = vld [vmem:[%s15 + $0x3c] sm:$0xf]
        %v1584 = vld [vmem:[%s15 + $0x40] sm:$0xf]
        %v1585 = vld [vmem:[%s15 + $0x44] sm:$0xf]
        %v1586 = vld [vmem:[%s15 + $0x48] sm:$0xf]
        %v1587 = vld [vmem:[%s15 + $0x4c] sm:$0xf]
        %v1588 = vld [vmem:[%s15 + $0x50] sm:$0xf]
        %v1589 = vld [vmem:[%s15 + $0x54] sm:$0xf]
        %v1590 = vld [vmem:[%s15 + $0x58] sm:$0xf]
        %v1591 = vld [vmem:[%s15 + $0x5c] sm:$0xf]
        %v1592 = vld [vmem:[%s15 + $0x60] sm:$0xf]
        %v1593 = vld [vmem:[%s15 + $0x64] sm:$0xf]
        %v1594 = vld [vmem:[%s15 + $0x68] sm:$0xf]
        %v1595 = vld [vmem:[%s15 + $0x6c] sm:$0xf]
        %v1596 = vld [vmem:[%s15 + $0x70] sm:$0xf]
        %v1597 = vld [vmem:[%s15 + $0x74] sm:$0xf]
        %v1598 = vld [vmem:[%s15 + $0x78] sm:$0xf]
        %v1599 = vld [vmem:[%s15 + $0x7c] sm:$0xf]
        %v1600 = vld [vmem:[%s15 + $0x80] sm:$0xf]
        %v1601 = vld [vmem:[%s15 + $0x84] sm:$0xf]
        %v1602 = vld [vmem:[%s15 + $0x88] sm:$0xf]
        %v1603 = vld [vmem:[%s15 + $0x8c] sm:$0xf]
        %v1604 = vpack.c.bf16 %v1518, %v1514
        %v1605 = vpack.c.bf16 %v1520, %v1516
        %v1606 = vpack.c.bf16 %v1528, %v1524
        %v1607 = vpack.c.bf16 %v1530, %v1526
        %v1644 = vunpack.c.l.b16 %v1568
        %v1645 = vunpack.c.l.b16 %v1569
        %v1646 = vunpack.c.l.b16 %v1570
        %v1647 = vunpack.c.l.b16 %v1571
        %v1648 = vunpack.c.l.b16 %v1572
        %v1649 = vunpack.c.l.b16 %v1573
        %v1650 = vunpack.c.l.b16 %v1574
        %v1651 = vunpack.c.l.b16 %v1575
        %v1652 = vunpack.c.l.b16 %v1576
        %v1653 = vunpack.c.l.b16 %v1577
        %v1654 = vunpack.c.l.b16 %v1578
        %v1655 = vunpack.c.l.b16 %v1579
        %v1656 = vunpack.c.l.b16 %v1580
        %v1657 = vunpack.c.l.b16 %v1581
        %v1658 = vunpack.c.l.b16 %v1582
        %v1659 = vunpack.c.l.b16 %v1583
        %v1660 = vunpack.c.l.b16 %v1584
        %v1661 = vunpack.c.l.b16 %v1585
        %v1662 = vunpack.c.l.b16 %v1586
        %v1663 = vunpack.c.l.b16 %v1587
        %v1664 = vunpack.c.l.b16 %v1588
        %v1665 = vunpack.c.l.b16 %v1589
        %v1666 = vunpack.c.l.b16 %v1590
        %v1667 = vunpack.c.l.b16 %v1591
        %v1668 = vunpack.c.l.b16 %v1592
        %v1669 = vunpack.c.l.b16 %v1593
        %v1670 = vunpack.c.l.b16 %v1594
        %v1671 = vunpack.c.l.b16 %v1595
        %v1672 = vunpack.c.l.b16 %v1596
        %v1673 = vunpack.c.l.b16 %v1597
        %v1674 = vunpack.c.l.b16 %v1598
        %v1675 = vunpack.c.l.b16 %v1599
        %v1676 = vunpack.c.l.b16 %v1600
        %v1677 = vunpack.c.l.b16 %v1601
        %v1678 = vunpack.c.l.b16 %v1602
        %v1679 = vunpack.c.l.b16 %v1603
        %v1680 = vpack.c.b16 %v1645, %v1644
        %v1681 = vpack.c.b16 %v1647, %v1646
        %v1682 = vpack.c.b16 %v1649, %v1648
        %v1683 = vpack.c.b16 %v1651, %v1650
        %v1684 = vpack.c.b16 %v1653, %v1652
        %v1685 = vpack.c.b16 %v1655, %v1654
        %v1686 = vpack.c.b16 %v1657, %v1656
        %v1687 = vpack.c.b16 %v1659, %v1658
        %v1688 = vpack.c.b16 %v1661, %v1660
        %v1689 = vpack.c.b16 %v1663, %v1662
        %v1690 = vpack.c.b16 %v1665, %v1664
        %v1691 = vpack.c.b16 %v1667, %v1666
        %v1692 = vpack.c.b16 %v1669, %v1668
        %v1693 = vpack.c.b16 %v1671, %v1670
        %v1694 = vpack.c.b16 %v1673, %v1672
        %v1695 = vpack.c.b16 %v1675, %v1674
        %v1696 = vpack.c.b16 %v1677, %v1676
        %v1697 = vpack.c.b16 %v1679, %v1678
        %v1699 = vsel %vm1161, %v1680, 0
        %v1702 = vsel %vm1161, %v1681, 0
        %v1705 = vsel %vm1161, %v1682, 0
        %v1708 = vsel %vm1161, %v1683, 0
        %v1711 = vsel %vm1161, %v1684, 0
        %v1714 = vsel %vm1161, %v1685, 0
        %v1717 = vsel %vm1161, %v1686, 0
        %v1720 = vsel %vm1161, %v1687, 0
        %v1723 = vsel %vm1161, %v1688, 0
        %v1726 = vsel %vm1161, %v1689, 0
        %v1729 = vsel %vm1161, %v1690, 0
        %v1732 = vsel %vm1161, %v1691, 0
        %v1735 = vsel %vm1161, %v1692, 0
        %v1738 = vsel %vm1161, %v1693, 0
        %v1741 = vsel %vm1161, %v1694, 0
        %v1744 = vsel %vm1161, %v1695, 0
        %v1747 = vsel %vm1161, %v1696, 0
        %v1750 = vsel %vm1161, %v1697, 0
        %1752 = vmatprep.subr.bf16.mxu0 0
        %1753 = vmatpush1.bf16.msra.mxu0 0
        %1754 = vmatprep.subr.bf16.mxu0 0
        %1755 = vmatpush1.bf16.msra.mxu0 0
        %1756 = vmatprep.subr.bf16.mxu0 0
        %1757 = vmatpush1.bf16.msra.mxu0 0
        %1758 = vmatprep.subr.bf16.mxu0 0
        %1759 = vmatpush1.bf16.msra.mxu0 0
        %1760 = vmatprep.subr.bf16.mxu0 0
        %1761 = vmatpush1.bf16.msra.mxu0 0
        %1762 = vmatprep.subr.bf16.mxu0 0
        %1763 = vmatpush1.bf16.msra.mxu0 0
        %1764 = vmatprep.subr.bf16.mxu0 %v1607
        %1765 = vmatpush1.bf16.msra.mxu0 %v1606
        %1766 = vmatprep.subr.bf16.mxu0 %v1605
        %1767 = vmatpush1.bf16.msra.mxu0 %v1604
        %1768 = vmatprep.subr.bf16.mxu0 0
        %1769 = vmatpush2.bf16.msra.mxu0 0
        %1770 = vmatprep.subr.bf16.mxu0 0
        %1771 = vmatpush2.bf16.msra.mxu0 0
        %1772 = vmatprep.subr.bf16.mxu0 0
        %1773 = vmatpush2.bf16.msra.mxu0 0
        %1774 = vmatprep.subr.bf16.mxu0 0
        %1775 = vmatpush2.bf16.msra.mxu0 0
        %1776 = vmatprep.subr.bf16.mxu0 0
        %1777 = vmatpush2.bf16.msra.mxu0 0
        %1778 = vmatprep.subr.bf16.mxu0 0
        %1779 = vmatpush2.bf16.msra.mxu0 0
        %1780 = vmatprep.subr.bf16.mxu0 0
        %1781 = vmatpush2.bf16.msra.mxu0 0
        %1782 = vmatprep.subr.bf16.mxu0 0
        %1783 = vmatpush2.bf16.msra.mxu0 0
        %1784 = vmatprep.mubr.bf16.mxu0 0
        %1785 = vmatmul.mubr.bf16.gmra.mxu0 %v1699
        %v1786 = vpop.f32.mrf.mxu0
        %v1787 = vadd.f32 0.0, %v1786
        %v1788 = vpop.f32.mrf.mxu0
        %v1789 = vadd.f32 0.0, %v1788
        %v1790 = vpop.f32.mrf.mxu0
        %v1791 = vadd.f32 0.0, %v1790
        %v1792 = vpop.f32.mrf.mxu0
        %v1793 = vadd.f32 0.0, %v1792
        %1794 = vmatprep.mubr.bf16.mxu0 0
        %1795 = vmatmul.mubr.bf16.gmra.mxu0 %v1702
        %v1796 = vpop.f32.mrf.mxu0
        %v1797 = vadd.f32 0.0, %v1796
        %v1798 = vpop.f32.mrf.mxu0
        %v1799 = vadd.f32 0.0, %v1798
        %v1800 = vpop.f32.mrf.mxu0
        %v1801 = vadd.f32 0.0, %v1800
        %v1802 = vpop.f32.mrf.mxu0
        %v1803 = vadd.f32 0.0, %v1802
        %1804 = vmatprep.mubr.bf16.mxu0 0
        %1805 = vmatmul.mubr.bf16.gmra.mxu0 %v1705
        %v1806 = vpop.f32.mrf.mxu0
        %v1807 = vadd.f32 0.0, %v1806
        %v1808 = vpop.f32.mrf.mxu0
        %v1809 = vadd.f32 0.0, %v1808
        %v1810 = vpop.f32.mrf.mxu0
        %v1811 = vadd.f32 0.0, %v1810
        %v1812 = vpop.f32.mrf.mxu0
        %v1813 = vadd.f32 0.0, %v1812
        %1814 = vmatprep.mubr.bf16.mxu0 0
        %1815 = vmatmul.mubr.bf16.gmra.mxu0 %v1708
        %v1816 = vpop.f32.mrf.mxu0
        %v1817 = vadd.f32 0.0, %v1816
        %v1818 = vpop.f32.mrf.mxu0
        %v1819 = vadd.f32 0.0, %v1818
        %v1820 = vpop.f32.mrf.mxu0
        %v1821 = vadd.f32 0.0, %v1820
        %v1822 = vpop.f32.mrf.mxu0
        %v1823 = vadd.f32 0.0, %v1822
        %1824 = vmatprep.mubr.bf16.mxu0 0
        %1825 = vmatmul.mubr.bf16.gmra.mxu0 %v1711
        %v1826 = vpop.f32.mrf.mxu0
        %v1827 = vadd.f32 0.0, %v1826
        %v1828 = vpop.f32.mrf.mxu0
        %v1829 = vadd.f32 0.0, %v1828
        %v1830 = vpop.f32.mrf.mxu0
        %v1831 = vadd.f32 0.0, %v1830
        %v1832 = vpop.f32.mrf.mxu0
        %v1833 = vadd.f32 0.0, %v1832
        %1834 = vmatprep.mubr.bf16.mxu0 0
        %1835 = vmatmul.mubr.bf16.gmra.mxu0 %v1714
        %v1836 = vpop.f32.mrf.mxu0
        %v1837 = vadd.f32 0.0, %v1836
        %v1838 = vpop.f32.mrf.mxu0
        %v1839 = vadd.f32 0.0, %v1838
        %v1840 = vpop.f32.mrf.mxu0
        %v1841 = vadd.f32 0.0, %v1840
        %v1842 = vpop.f32.mrf.mxu0
        %v1843 = vadd.f32 0.0, %v1842
        %1844 = vmatprep.mubr.bf16.mxu0 0
        %1845 = vmatmul.mubr.bf16.gmra.mxu0 %v1717
        %v1846 = vpop.f32.mrf.mxu0
        %v1847 = vadd.f32 0.0, %v1846
        %v1848 = vpop.f32.mrf.mxu0
        %v1849 = vadd.f32 0.0, %v1848
        %v1850 = vpop.f32.mrf.mxu0
        %v1851 = vadd.f32 0.0, %v1850
        %v1852 = vpop.f32.mrf.mxu0
        %v1853 = vadd.f32 0.0, %v1852
        %1854 = vmatprep.mubr.bf16.mxu0 0
        %1855 = vmatmul.mubr.bf16.gmra.mxu0 %v1720
        %v1856 = vpop.f32.mrf.mxu0
        %v1857 = vadd.f32 0.0, %v1856
        %v1858 = vpop.f32.mrf.mxu0
        %v1859 = vadd.f32 0.0, %v1858
        %v1860 = vpop.f32.mrf.mxu0
        %v1861 = vadd.f32 0.0, %v1860
        %v1862 = vpop.f32.mrf.mxu0
        %v1863 = vadd.f32 0.0, %v1862
        %1864 = vmatprep.mubr.bf16.mxu0 0
        %1865 = vmatmul.mubr.bf16.gmra.mxu0 %v1723
        %v1866 = vpop.f32.mrf.mxu0
        %v1867 = vadd.f32 0.0, %v1866
        %v1868 = vpop.f32.mrf.mxu0
        %v1869 = vadd.f32 0.0, %v1868
        %v1870 = vpop.f32.mrf.mxu0
        %v1871 = vadd.f32 0.0, %v1870
        %v1872 = vpop.f32.mrf.mxu0
        %v1873 = vadd.f32 0.0, %v1872
        %1874 = vmatprep.mubr.bf16.mxu0 0
        %1875 = vmatmul.mubr.bf16.gmra.mxu0 %v1726
        %v1876 = vpop.f32.mrf.mxu0
        %v1877 = vadd.f32 0.0, %v1876
        %v1878 = vpop.f32.mrf.mxu0
        %v1879 = vadd.f32 0.0, %v1878
        %v1880 = vpop.f32.mrf.mxu0
        %v1881 = vadd.f32 0.0, %v1880
        %v1882 = vpop.f32.mrf.mxu0
        %v1883 = vadd.f32 0.0, %v1882
        %1884 = vmatprep.mubr.bf16.mxu0 0
        %1885 = vmatmul.mubr.bf16.gmra.mxu0 %v1729
        %v1886 = vpop.f32.mrf.mxu0
        %v1887 = vadd.f32 0.0, %v1886
        %v1888 = vpop.f32.mrf.mxu0
        %v1889 = vadd.f32 0.0, %v1888
        %v1890 = vpop.f32.mrf.mxu0
        %v1891 = vadd.f32 0.0, %v1890
        %v1892 = vpop.f32.mrf.mxu0
        %v1893 = vadd.f32 0.0, %v1892
        %1894 = vmatprep.mubr.bf16.mxu0 0
        %1895 = vmatmul.mubr.bf16.gmra.mxu0 %v1732
        %v1896 = vpop.f32.mrf.mxu0
        %v1897 = vadd.f32 0.0, %v1896
        %v1898 = vpop.f32.mrf.mxu0
        %v1899 = vadd.f32 0.0, %v1898
        %v1900 = vpop.f32.mrf.mxu0
        %v1901 = vadd.f32 0.0, %v1900
        %v1902 = vpop.f32.mrf.mxu0
        %v1903 = vadd.f32 0.0, %v1902
        %1904 = vmatprep.mubr.bf16.mxu0 0
        %1905 = vmatmul.mubr.bf16.gmra.mxu0 %v1735
        %v1906 = vpop.f32.mrf.mxu0
        %v1907 = vadd.f32 0.0, %v1906
        %v1908 = vpop.f32.mrf.mxu0
        %v1909 = vadd.f32 0.0, %v1908
        %v1910 = vpop.f32.mrf.mxu0
        %v1911 = vadd.f32 0.0, %v1910
        %v1912 = vpop.f32.mrf.mxu0
        %v1913 = vadd.f32 0.0, %v1912
        %1914 = vmatprep.mubr.bf16.mxu0 0
        %1915 = vmatmul.mubr.bf16.gmra.mxu0 %v1738
        %v1916 = vpop.f32.mrf.mxu0
        %v1917 = vadd.f32 0.0, %v1916
        %v1918 = vpop.f32.mrf.mxu0
        %v1919 = vadd.f32 0.0, %v1918
        %v1920 = vpop.f32.mrf.mxu0
        %v1921 = vadd.f32 0.0, %v1920
        %v1922 = vpop.f32.mrf.mxu0
        %v1923 = vadd.f32 0.0, %v1922
        %1924 = vmatprep.mubr.bf16.mxu0 0
        %1925 = vmatmul.mubr.bf16.gmra.mxu0 %v1741
        %v1926 = vpop.f32.mrf.mxu0
        %v1927 = vadd.f32 0.0, %v1926
        %v1928 = vpop.f32.mrf.mxu0
        %v1929 = vadd.f32 0.0, %v1928
        %v1930 = vpop.f32.mrf.mxu0
        %v1931 = vadd.f32 0.0, %v1930
        %v1932 = vpop.f32.mrf.mxu0
        %v1933 = vadd.f32 0.0, %v1932
        %1934 = vmatprep.mubr.bf16.mxu0 0
        %1935 = vmatmul.mubr.bf16.gmra.mxu0 %v1744
        %v1936 = vpop.f32.mrf.mxu0
        %v1937 = vadd.f32 0.0, %v1936
        %v1938 = vpop.f32.mrf.mxu0
        %v1939 = vadd.f32 0.0, %v1938
        %v1940 = vpop.f32.mrf.mxu0
        %v1941 = vadd.f32 0.0, %v1940
        %v1942 = vpop.f32.mrf.mxu0
        %v1943 = vadd.f32 0.0, %v1942
        %1944 = vmatprep.mubr.bf16.mxu0 0
        %1945 = vmatmul.mubr.bf16.gmra.mxu0 %v1747
        %v1946 = vpop.f32.mrf.mxu0
        %v1947 = vadd.f32 0.0, %v1946
        %v1948 = vpop.f32.mrf.mxu0
        %v1949 = vadd.f32 0.0, %v1948
        %v1950 = vpop.f32.mrf.mxu0
        %v1951 = vadd.f32 0.0, %v1950
        %v1952 = vpop.f32.mrf.mxu0
        %v1953 = vadd.f32 0.0, %v1952
        %1954 = vmatprep.mubr.bf16.mxu0 0
        %1955 = vmatmul.mubr.bf16.gmra.mxu0 %v1750
        %v1956 = vpop.f32.mrf.mxu0
        %v1957 = vadd.f32 0.0, %v1956
        %v1958 = vpop.f32.mrf.mxu0
        %v1959 = vadd.f32 0.0, %v1958
        %v1960 = vpop.f32.mrf.mxu0
        %v1961 = vadd.f32 0.0, %v1960
        %v1962 = vpop.f32.mrf.mxu0
        %v1963 = vadd.f32 0.0, %v1962
        %1964 = vdwg.mxu0
        %v2001 = vunpack.c.l.b16 %v1532
        %v2002 = vunpack.c.l.b16 %v1533
        %v2003 = vunpack.c.l.b16 %v1534
        %v2004 = vunpack.c.l.b16 %v1535
        %v2005 = vunpack.c.l.b16 %v1536
        %v2006 = vunpack.c.l.b16 %v1537
        %v2007 = vunpack.c.l.b16 %v1538
        %v2008 = vunpack.c.l.b16 %v1539
        %v2009 = vunpack.c.l.b16 %v1540
        %v2010 = vunpack.c.l.b16 %v1541
        %v2011 = vunpack.c.l.b16 %v1542
        %v2012 = vunpack.c.l.b16 %v1543
        %v2013 = vunpack.c.l.b16 %v1544
        %v2014 = vunpack.c.l.b16 %v1545
        %v2015 = vunpack.c.l.b16 %v1546
        %v2016 = vunpack.c.l.b16 %v1547
        %v2017 = vunpack.c.l.b16 %v1548
        %v2018 = vunpack.c.l.b16 %v1549
        %v2019 = vunpack.c.l.b16 %v1550
        %v2020 = vunpack.c.l.b16 %v1551
        %v2021 = vunpack.c.l.b16 %v1552
        %v2022 = vunpack.c.l.b16 %v1553
        %v2023 = vunpack.c.l.b16 %v1554
        %v2024 = vunpack.c.l.b16 %v1555
        %v2025 = vunpack.c.l.b16 %v1556
        %v2026 = vunpack.c.l.b16 %v1557
        %v2027 = vunpack.c.l.b16 %v1558
        %v2028 = vunpack.c.l.b16 %v1559
        %v2029 = vunpack.c.l.b16 %v1560
        %v2030 = vunpack.c.l.b16 %v1561
        %v2031 = vunpack.c.l.b16 %v1562
        %v2032 = vunpack.c.l.b16 %v1563
        %v2033 = vunpack.c.l.b16 %v1564
        %v2034 = vunpack.c.l.b16 %v1565
        %v2035 = vunpack.c.l.b16 %v1566
        %v2036 = vunpack.c.l.b16 %v1567
        %v2037 = vpack.c.b16 %v2002, %v2001
        %v2038 = vpack.c.b16 %v2004, %v2003
        %v2039 = vpack.c.b16 %v2006, %v2005
        %v2040 = vpack.c.b16 %v2008, %v2007
        %v2041 = vpack.c.b16 %v2010, %v2009
        %v2042 = vpack.c.b16 %v2012, %v2011
        %v2043 = vpack.c.b16 %v2014, %v2013
        %v2044 = vpack.c.b16 %v2016, %v2015
        %v2045 = vpack.c.b16 %v2018, %v2017
        %v2046 = vpack.c.b16 %v2020, %v2019
        %v2047 = vpack.c.b16 %v2022, %v2021
        %v2048 = vpack.c.b16 %v2024, %v2023
        %v2049 = vpack.c.b16 %v2026, %v2025
        %v2050 = vpack.c.b16 %v2028, %v2027
        %v2051 = vpack.c.b16 %v2030, %v2029
        %v2052 = vpack.c.b16 %v2032, %v2031
        %v2053 = vpack.c.b16 %v2034, %v2033
        %v2054 = vpack.c.b16 %v2036, %v2035
        %v2056 = vsel %vm1161, %v2037, 0
        %v2059 = vsel %vm1161, %v2038, 0
        %v2062 = vsel %vm1161, %v2039, 0
        %v2065 = vsel %vm1161, %v2040, 0
        %v2068 = vsel %vm1161, %v2041, 0
        %v2071 = vsel %vm1161, %v2042, 0
        %v2074 = vsel %vm1161, %v2043, 0
        %v2077 = vsel %vm1161, %v2044, 0
        %v2080 = vsel %vm1161, %v2045, 0
        %v2083 = vsel %vm1161, %v2046, 0
        %v2086 = vsel %vm1161, %v2047, 0
        %v2089 = vsel %vm1161, %v2048, 0
        %v2092 = vsel %vm1161, %v2049, 0
        %v2095 = vsel %vm1161, %v2050, 0
        %v2098 = vsel %vm1161, %v2051, 0
        %v2101 = vsel %vm1161, %v2052, 0
        %v2104 = vsel %vm1161, %v2053, 0
        %v2107 = vsel %vm1161, %v2054, 0
        %2109 = vmatprep.subr.bf16.mxu0 0
        %2110 = vmatpush1.bf16.msra.mxu0 0
        %2111 = vmatprep.subr.bf16.mxu0 0
        %2112 = vmatpush1.bf16.msra.mxu0 0
        %2113 = vmatprep.subr.bf16.mxu0 0
        %2114 = vmatpush1.bf16.msra.mxu0 0
        %2115 = vmatprep.subr.bf16.mxu0 0
        %2116 = vmatpush1.bf16.msra.mxu0 0
        %2117 = vmatprep.subr.bf16.mxu0 0
        %2118 = vmatpush1.bf16.msra.mxu0 0
        %2119 = vmatprep.subr.bf16.mxu0 0
        %2120 = vmatpush1.bf16.msra.mxu0 0
        %2121 = vmatprep.subr.bf16.mxu0 %v909
        %2122 = vmatpush1.bf16.msra.mxu0 %v908
        %2123 = vmatprep.subr.bf16.mxu0 %v907
        %2124 = vmatpush1.bf16.msra.mxu0 %v906
        %2125 = vmatprep.subr.bf16.mxu0 0
        %2126 = vmatpush2.bf16.msra.mxu0 0
        %2127 = vmatprep.subr.bf16.mxu0 0
        %2128 = vmatpush2.bf16.msra.mxu0 0
        %2129 = vmatprep.subr.bf16.mxu0 0
        %2130 = vmatpush2.bf16.msra.mxu0 0
        %2131 = vmatprep.subr.bf16.mxu0 0
        %2132 = vmatpush2.bf16.msra.mxu0 0
        %2133 = vmatprep.subr.bf16.mxu0 0
        %2134 = vmatpush2.bf16.msra.mxu0 0
        %2135 = vmatprep.subr.bf16.mxu0 0
        %2136 = vmatpush2.bf16.msra.mxu0 0
        %2137 = vmatprep.subr.bf16.mxu0 0
        %2138 = vmatpush2.bf16.msra.mxu0 0
        %2139 = vmatprep.subr.bf16.mxu0 0
        %2140 = vmatpush2.bf16.msra.mxu0 0
        %2141 = vmatprep.mubr.bf16.mxu0 0
        %2142 = vmatmul.mubr.bf16.gmra.mxu0 %v2056
        %v2143 = vpop.f32.mrf.mxu0
        %v2144 = vadd.f32 %v1787, %v2143
        %v2145 = vpop.f32.mrf.mxu0
        %v2146 = vadd.f32 %v1789, %v2145
        %v2147 = vpop.f32.mrf.mxu0
        %v2148 = vadd.f32 %v1791, %v2147
        %v2149 = vpop.f32.mrf.mxu0
        %v2150 = vadd.f32 %v1793, %v2149
        %2151 = vmatprep.mubr.bf16.mxu0 0
        %2152 = vmatmul.mubr.bf16.gmra.mxu0 %v2059
        %v2153 = vpop.f32.mrf.mxu0
        %v2154 = vadd.f32 %v1797, %v2153
        %v2155 = vpop.f32.mrf.mxu0
        %v2156 = vadd.f32 %v1799, %v2155
        %v2157 = vpop.f32.mrf.mxu0
        %v2158 = vadd.f32 %v1801, %v2157
        %v2159 = vpop.f32.mrf.mxu0
        %v2160 = vadd.f32 %v1803, %v2159
        %2161 = vmatprep.mubr.bf16.mxu0 0
        %2162 = vmatmul.mubr.bf16.gmra.mxu0 %v2062
        %v2163 = vpop.f32.mrf.mxu0
        %v2164 = vadd.f32 %v1807, %v2163
        %v2165 = vpop.f32.mrf.mxu0
        %v2166 = vadd.f32 %v1809, %v2165
        %v2167 = vpop.f32.mrf.mxu0
        %v2168 = vadd.f32 %v1811, %v2167
        %v2169 = vpop.f32.mrf.mxu0
        %v2170 = vadd.f32 %v1813, %v2169
        %2171 = vmatprep.mubr.bf16.mxu0 0
        %2172 = vmatmul.mubr.bf16.gmra.mxu0 %v2065
        %v2173 = vpop.f32.mrf.mxu0
        %v2174 = vadd.f32 %v1817, %v2173
        %v2175 = vpop.f32.mrf.mxu0
        %v2176 = vadd.f32 %v1819, %v2175
        %v2177 = vpop.f32.mrf.mxu0
        %v2178 = vadd.f32 %v1821, %v2177
        %v2179 = vpop.f32.mrf.mxu0
        %v2180 = vadd.f32 %v1823, %v2179
        %2181 = vmatprep.mubr.bf16.mxu0 0
        %2182 = vmatmul.mubr.bf16.gmra.mxu0 %v2068
        %v2183 = vpop.f32.mrf.mxu0
        %v2184 = vadd.f32 %v1827, %v2183
        %v2185 = vpop.f32.mrf.mxu0
        %v2186 = vadd.f32 %v1829, %v2185
        %v2187 = vpop.f32.mrf.mxu0
        %v2188 = vadd.f32 %v1831, %v2187
        %v2189 = vpop.f32.mrf.mxu0
        %v2190 = vadd.f32 %v1833, %v2189
        %2191 = vmatprep.mubr.bf16.mxu0 0
        %2192 = vmatmul.mubr.bf16.gmra.mxu0 %v2071
        %v2193 = vpop.f32.mrf.mxu0
        %v2194 = vadd.f32 %v1837, %v2193
        %v2195 = vpop.f32.mrf.mxu0
        %v2196 = vadd.f32 %v1839, %v2195
        %v2197 = vpop.f32.mrf.mxu0
        %v2198 = vadd.f32 %v1841, %v2197
        %v2199 = vpop.f32.mrf.mxu0
        %v2200 = vadd.f32 %v1843, %v2199
        %2201 = vmatprep.mubr.bf16.mxu0 0
        %2202 = vmatmul.mubr.bf16.gmra.mxu0 %v2074
        %v2203 = vpop.f32.mrf.mxu0
        %v2204 = vadd.f32 %v1847, %v2203
        %v2205 = vpop.f32.mrf.mxu0
        %v2206 = vadd.f32 %v1849, %v2205
        %v2207 = vpop.f32.mrf.mxu0
        %v2208 = vadd.f32 %v1851, %v2207
        %v2209 = vpop.f32.mrf.mxu0
        %v2210 = vadd.f32 %v1853, %v2209
        %2211 = vmatprep.mubr.bf16.mxu0 0
        %2212 = vmatmul.mubr.bf16.gmra.mxu0 %v2077
        %v2213 = vpop.f32.mrf.mxu0
        %v2214 = vadd.f32 %v1857, %v2213
        %v2215 = vpop.f32.mrf.mxu0
        %v2216 = vadd.f32 %v1859, %v2215
        %v2217 = vpop.f32.mrf.mxu0
        %v2218 = vadd.f32 %v1861, %v2217
        %v2219 = vpop.f32.mrf.mxu0
        %v2220 = vadd.f32 %v1863, %v2219
        %2221 = vmatprep.mubr.bf16.mxu0 0
        %2222 = vmatmul.mubr.bf16.gmra.mxu0 %v2080
        %v2223 = vpop.f32.mrf.mxu0
        %v2224 = vadd.f32 %v1867, %v2223
        %v2225 = vpop.f32.mrf.mxu0
        %v2226 = vadd.f32 %v1869, %v2225
        %v2227 = vpop.f32.mrf.mxu0
        %v2228 = vadd.f32 %v1871, %v2227
        %v2229 = vpop.f32.mrf.mxu0
        %v2230 = vadd.f32 %v1873, %v2229
        %2231 = vmatprep.mubr.bf16.mxu0 0
        %2232 = vmatmul.mubr.bf16.gmra.mxu0 %v2083
        %v2233 = vpop.f32.mrf.mxu0
        %v2234 = vadd.f32 %v1877, %v2233
        %v2235 = vpop.f32.mrf.mxu0
        %v2236 = vadd.f32 %v1879, %v2235
        %v2237 = vpop.f32.mrf.mxu0
        %v2238 = vadd.f32 %v1881, %v2237
        %v2239 = vpop.f32.mrf.mxu0
        %v2240 = vadd.f32 %v1883, %v2239
        %2241 = vmatprep.mubr.bf16.mxu0 0
        %2242 = vmatmul.mubr.bf16.gmra.mxu0 %v2086
        %v2243 = vpop.f32.mrf.mxu0
        %v2244 = vadd.f32 %v1887, %v2243
        %v2245 = vpop.f32.mrf.mxu0
        %v2246 = vadd.f32 %v1889, %v2245
        %v2247 = vpop.f32.mrf.mxu0
        %v2248 = vadd.f32 %v1891, %v2247
        %v2249 = vpop.f32.mrf.mxu0
        %v2250 = vadd.f32 %v1893, %v2249
        %2251 = vmatprep.mubr.bf16.mxu0 0
        %2252 = vmatmul.mubr.bf16.gmra.mxu0 %v2089
        %v2253 = vpop.f32.mrf.mxu0
        %v2254 = vadd.f32 %v1897, %v2253
        %v2255 = vpop.f32.mrf.mxu0
        %v2256 = vadd.f32 %v1899, %v2255
        %v2257 = vpop.f32.mrf.mxu0
        %v2258 = vadd.f32 %v1901, %v2257
        %v2259 = vpop.f32.mrf.mxu0
        %v2260 = vadd.f32 %v1903, %v2259
        %2261 = vmatprep.mubr.bf16.mxu0 0
        %2262 = vmatmul.mubr.bf16.gmra.mxu0 %v2092
        %v2263 = vpop.f32.mrf.mxu0
        %v2264 = vadd.f32 %v1907, %v2263
        %v2265 = vpop.f32.mrf.mxu0
        %v2266 = vadd.f32 %v1909, %v2265
        %v2267 = vpop.f32.mrf.mxu0
        %v2268 = vadd.f32 %v1911, %v2267
        %v2269 = vpop.f32.mrf.mxu0
        %v2270 = vadd.f32 %v1913, %v2269
        %2271 = vmatprep.mubr.bf16.mxu0 0
        %2272 = vmatmul.mubr.bf16.gmra.mxu0 %v2095
        %v2273 = vpop.f32.mrf.mxu0
        %v2274 = vadd.f32 %v1917, %v2273
        %v2275 = vpop.f32.mrf.mxu0
        %v2276 = vadd.f32 %v1919, %v2275
        %v2277 = vpop.f32.mrf.mxu0
        %v2278 = vadd.f32 %v1921, %v2277
        %v2279 = vpop.f32.mrf.mxu0
        %v2280 = vadd.f32 %v1923, %v2279
        %2281 = vmatprep.mubr.bf16.mxu0 0
        %2282 = vmatmul.mubr.bf16.gmra.mxu0 %v2098
        %v2283 = vpop.f32.mrf.mxu0
        %v2284 = vadd.f32 %v1927, %v2283
        %v2285 = vpop.f32.mrf.mxu0
        %v2286 = vadd.f32 %v1929, %v2285
        %v2287 = vpop.f32.mrf.mxu0
        %v2288 = vadd.f32 %v1931, %v2287
        %v2289 = vpop.f32.mrf.mxu0
        %v2290 = vadd.f32 %v1933, %v2289
        %2291 = vmatprep.mubr.bf16.mxu0 0
        %2292 = vmatmul.mubr.bf16.gmra.mxu0 %v2101
        %v2293 = vpop.f32.mrf.mxu0
        %v2294 = vadd.f32 %v1937, %v2293
        %v2295 = vpop.f32.mrf.mxu0
        %v2296 = vadd.f32 %v1939, %v2295
        %v2297 = vpop.f32.mrf.mxu0
        %v2298 = vadd.f32 %v1941, %v2297
        %v2299 = vpop.f32.mrf.mxu0
        %v2300 = vadd.f32 %v1943, %v2299
        %2301 = vmatprep.mubr.bf16.mxu0 0
        %2302 = vmatmul.mubr.bf16.gmra.mxu0 %v2104
        %v2303 = vpop.f32.mrf.mxu0
        %v2304 = vadd.f32 %v1947, %v2303
        %v2305 = vpop.f32.mrf.mxu0
        %v2306 = vadd.f32 %v1949, %v2305
        %v2307 = vpop.f32.mrf.mxu0
        %v2308 = vadd.f32 %v1951, %v2307
        %v2309 = vpop.f32.mrf.mxu0
        %v2310 = vadd.f32 %v1953, %v2309
        %2311 = vmatprep.mubr.bf16.mxu0 0
        %2312 = vmatmul.mubr.bf16.gmra.mxu0 %v2107
        %v2313 = vpop.f32.mrf.mxu0
        %v2314 = vadd.f32 %v1957, %v2313
        %v2315 = vpop.f32.mrf.mxu0
        %v2316 = vadd.f32 %v1959, %v2315
        %v2317 = vpop.f32.mrf.mxu0
        %v2318 = vadd.f32 %v1961, %v2317
        %v2319 = vpop.f32.mrf.mxu0
        %v2320 = vadd.f32 %v1963, %v2319
        %2321 = vdwg.mxu0
        %2322 = vrot.lane.b32.xlu0 %v2144, 17
        %v2323 = vpop.permute.xlu0 %2322
        %2324 = vrot.lane.b32.xlu0 %v2148, 17
        %v2325 = vpop.permute.xlu0 %2324
        %2326 = vrot.lane.b32.xlu0 %v2154, 17
        %v2327 = vpop.permute.xlu0 %2326
        %2328 = vrot.lane.b32.xlu0 %v2158, 17
        %v2329 = vpop.permute.xlu0 %2328
        %2330 = vrot.lane.b32.xlu0 %v2146, 17
        %v2331 = vpop.permute.xlu0 %2330
        %2332 = vrot.lane.b32.xlu0 %v2150, 17
        %v2333 = vpop.permute.xlu0 %2332
        %2334 = vrot.lane.b32.xlu0 %v2156, 17
        %v2335 = vpop.permute.xlu0 %2334
        %2336 = vrot.lane.b32.xlu0 %v2160, 17
        %v2337 = vpop.permute.xlu0 %2336
        %v2338 = vsel %vm651, %v2323, %v2331
        %v2339 = vsel %vm651, %v2325, %v2333
        %v2340 = vsel %vm651, %v2327, %v2335
        %v2341 = vsel %vm651, %v2329, %v2337
        %v2342 = vsel %vm651, %v2331, %v2323
        %v2343 = vsel %vm651, %v2333, %v2325
        %v2344 = vsel %vm651, %v2335, %v2327
        %v2345 = vsel %vm651, %v2337, %v2329
        %v2346 = vmul.f32 %v657, %v2342
        %v2347 = vmul.f32 %v661, %v2338
        %v2348 = vmul.f32 %v657, %v2343
        %v2349 = vmul.f32 %v661, %v2339
        %v2350 = vmul.f32 %v657, %v2344
        %v2351 = vmul.f32 %v661, %v2340
        %v2352 = vmul.f32 %v657, %v2345
        %v2353 = vmul.f32 %v661, %v2341
        %v2354 = vadd.f32 %v2224, %v2346
        %v2355 = vadd.f32 %v2226, %v2347
        %v2356 = vadd.f32 %v2228, %v2348
        %v2357 = vadd.f32 %v2230, %v2349
        %v2358 = vadd.f32 %v2234, %v2350
        %v2359 = vadd.f32 %v2236, %v2351
        %v2360 = vadd.f32 %v2238, %v2352
        %v2361 = vadd.f32 %v2240, %v2353
        %2362 = vrot.lane.b32.xlu0 %v2164, 16
        %v2363 = vpop.permute.xlu0 %2362
        %2364 = vrot.lane.b32.xlu0 %v2168, 16
        %v2365 = vpop.permute.xlu0 %2364
        %2366 = vrot.lane.b32.xlu0 %v2174, 16
        %v2367 = vpop.permute.xlu0 %2366
        %2368 = vrot.lane.b32.xlu0 %v2178, 16
        %v2369 = vpop.permute.xlu0 %2368
        %2370 = vrot.lane.b32.xlu0 %v2166, 16
        %v2371 = vpop.permute.xlu0 %2370
        %2372 = vrot.lane.b32.xlu0 %v2170, 16
        %v2373 = vpop.permute.xlu0 %2372
        %2374 = vrot.lane.b32.xlu0 %v2176, 16
        %v2375 = vpop.permute.xlu0 %2374
        %2376 = vrot.lane.b32.xlu0 %v2180, 16
        %v2377 = vpop.permute.xlu0 %2376
        %v2378 = vsel %vm668, %v2363, %v2371
        %v2379 = vsel %vm668, %v2365, %v2373
        %v2380 = vsel %vm668, %v2367, %v2375
        %v2381 = vsel %vm668, %v2369, %v2377
        %v2382 = vsel %vm668, %v2371, %v2363
        %v2383 = vsel %vm668, %v2373, %v2365
        %v2384 = vsel %vm668, %v2375, %v2367
        %v2385 = vsel %vm668, %v2377, %v2369
        %v2386 = vmul.f32 %v674, %v2382
        %v2387 = vmul.f32 %v678, %v2378
        %v2388 = vmul.f32 %v674, %v2383
        %v2389 = vmul.f32 %v678, %v2379
        %v2390 = vmul.f32 %v674, %v2384
        %v2391 = vmul.f32 %v678, %v2380
        %v2392 = vmul.f32 %v674, %v2385
        %v2393 = vmul.f32 %v678, %v2381
        %v2394 = vadd.f32 %v2354, %v2386
        %v2395 = vadd.f32 %v2355, %v2387
        %v2396 = vadd.f32 %v2356, %v2388
        %v2397 = vadd.f32 %v2357, %v2389
        %v2398 = vadd.f32 %v2358, %v2390
        %v2399 = vadd.f32 %v2359, %v2391
        %v2400 = vadd.f32 %v2360, %v2392
        %v2401 = vadd.f32 %v2361, %v2393
        %2402 = vrot.lane.b32.xlu0 %v2184, 15
        %v2403 = vpop.permute.xlu0 %2402
        %2404 = vrot.lane.b32.xlu0 %v2188, 15
        %v2405 = vpop.permute.xlu0 %2404
        %2406 = vrot.lane.b32.xlu0 %v2194, 15
        %v2407 = vpop.permute.xlu0 %2406
        %2408 = vrot.lane.b32.xlu0 %v2198, 15
        %v2409 = vpop.permute.xlu0 %2408
        %2410 = vrot.lane.b32.xlu0 %v2186, 15
        %v2411 = vpop.permute.xlu0 %2410
        %2412 = vrot.lane.b32.xlu0 %v2190, 15
        %v2413 = vpop.permute.xlu0 %2412
        %2414 = vrot.lane.b32.xlu0 %v2196, 15
        %v2415 = vpop.permute.xlu0 %2414
        %2416 = vrot.lane.b32.xlu0 %v2200, 15
        %v2417 = vpop.permute.xlu0 %2416
        %v2418 = vsel %vm685, %v2403, %v2411
        %v2419 = vsel %vm685, %v2405, %v2413
        %v2420 = vsel %vm685, %v2407, %v2415
        %v2421 = vsel %vm685, %v2409, %v2417
        %v2422 = vsel %vm685, %v2411, %v2403
        %v2423 = vsel %vm685, %v2413, %v2405
        %v2424 = vsel %vm685, %v2415, %v2407
        %v2425 = vsel %vm685, %v2417, %v2409
        %v2426 = vmul.f32 %v691, %v2422
        %v2427 = vmul.f32 %v695, %v2418
        %v2428 = vmul.f32 %v691, %v2423
        %v2429 = vmul.f32 %v695, %v2419
        %v2430 = vmul.f32 %v691, %v2424
        %v2431 = vmul.f32 %v695, %v2420
        %v2432 = vmul.f32 %v691, %v2425
        %v2433 = vmul.f32 %v695, %v2421
        %v2434 = vadd.f32 %v2394, %v2426
        %v2435 = vadd.f32 %v2395, %v2427
        %v2436 = vadd.f32 %v2396, %v2428
        %v2437 = vadd.f32 %v2397, %v2429
        %v2438 = vadd.f32 %v2398, %v2430
        %v2439 = vadd.f32 %v2399, %v2431
        %v2440 = vadd.f32 %v2400, %v2432
        %v2441 = vadd.f32 %v2401, %v2433
        %2442 = vrot.lane.b32.xlu0 %v2204, 1
        %v2443 = vpop.permute.xlu0 %2442
        %2444 = vrot.lane.b32.xlu0 %v2208, 1
        %v2445 = vpop.permute.xlu0 %2444
        %2446 = vrot.lane.b32.xlu0 %v2214, 1
        %v2447 = vpop.permute.xlu0 %2446
        %2448 = vrot.lane.b32.xlu0 %v2218, 1
        %v2449 = vpop.permute.xlu0 %2448
        %2450 = vrot.lane.b32.xlu0 %v2206, 1
        %v2451 = vpop.permute.xlu0 %2450
        %2452 = vrot.lane.b32.xlu0 %v2210, 1
        %v2453 = vpop.permute.xlu0 %2452
        %2454 = vrot.lane.b32.xlu0 %v2216, 1
        %v2455 = vpop.permute.xlu0 %2454
        %2456 = vrot.lane.b32.xlu0 %v2220, 1
        %v2457 = vpop.permute.xlu0 %2456
        %v2458 = vsel %vm702, %v2443, %v2451
        %v2459 = vsel %vm702, %v2445, %v2453
        %v2460 = vsel %vm702, %v2447, %v2455
        %v2461 = vsel %vm702, %v2449, %v2457
        %v2462 = vsel %vm702, %v2451, %v2443
        %v2463 = vsel %vm702, %v2453, %v2445
        %v2464 = vsel %vm702, %v2455, %v2447
        %v2465 = vsel %vm702, %v2457, %v2449
        %v2466 = vmul.f32 %v708, %v2462
        %v2467 = vmul.f32 %v712, %v2458
        %v2468 = vmul.f32 %v708, %v2463
        %v2469 = vmul.f32 %v712, %v2459
        %v2470 = vmul.f32 %v708, %v2464
        %v2471 = vmul.f32 %v712, %v2460
        %v2472 = vmul.f32 %v708, %v2465
        %v2473 = vmul.f32 %v712, %v2461
        %v2474 = vadd.f32 %v2434, %v2466
        %v2475 = vadd.f32 %v2435, %v2467
        %v2476 = vadd.f32 %v2436, %v2468
        %v2477 = vadd.f32 %v2437, %v2469
        %v2478 = vadd.f32 %v2438, %v2470
        %v2479 = vadd.f32 %v2439, %v2471
        %v2480 = vadd.f32 %v2440, %v2472
        %v2481 = vadd.f32 %v2441, %v2473
        %2482 = vrot.lane.b32.xlu0 %v2244, 127
        %v2483 = vpop.permute.xlu0 %2482
        %2484 = vrot.lane.b32.xlu0 %v2248, 127
        %v2485 = vpop.permute.xlu0 %2484
        %2486 = vrot.lane.b32.xlu0 %v2254, 127
        %v2487 = vpop.permute.xlu0 %2486
        %2488 = vrot.lane.b32.xlu0 %v2258, 127
        %v2489 = vpop.permute.xlu0 %2488
        %2490 = vrot.lane.b32.xlu0 %v2246, 127
        %v2491 = vpop.permute.xlu0 %2490
        %2492 = vrot.lane.b32.xlu0 %v2250, 127
        %v2493 = vpop.permute.xlu0 %2492
        %2494 = vrot.lane.b32.xlu0 %v2256, 127
        %v2495 = vpop.permute.xlu0 %2494
        %2496 = vrot.lane.b32.xlu0 %v2260, 127
        %v2497 = vpop.permute.xlu0 %2496
        %v2498 = vsel %vm719, %v2483, %v2491
        %v2499 = vsel %vm719, %v2485, %v2493
        %v2500 = vsel %vm719, %v2487, %v2495
        %v2501 = vsel %vm719, %v2489, %v2497
        %v2502 = vsel %vm719, %v2491, %v2483
        %v2503 = vsel %vm719, %v2493, %v2485
        %v2504 = vsel %vm719, %v2495, %v2487
        %v2505 = vsel %vm719, %v2497, %v2489
        %v2506 = vmul.f32 %v725, %v2498
        %v2507 = vmul.f32 %v729, %v2502
        %v2508 = vmul.f32 %v725, %v2499
        %v2509 = vmul.f32 %v729, %v2503
        %v2510 = vmul.f32 %v725, %v2500
        %v2511 = vmul.f32 %v729, %v2504
        %v2512 = vmul.f32 %v725, %v2501
        %v2513 = vmul.f32 %v729, %v2505
        %v2514 = vadd.f32 %v2474, %v2506
        %v2515 = vadd.f32 %v2475, %v2507
        %v2516 = vadd.f32 %v2476, %v2508
        %v2517 = vadd.f32 %v2477, %v2509
        %v2518 = vadd.f32 %v2478, %v2510
        %v2519 = vadd.f32 %v2479, %v2511
        %v2520 = vadd.f32 %v2480, %v2512
        %v2521 = vadd.f32 %v2481, %v2513
        %2522 = vrot.lane.b32.xlu0 %v2264, 113
        %v2523 = vpop.permute.xlu0 %2522
        %2524 = vrot.lane.b32.xlu0 %v2268, 113
        %v2525 = vpop.permute.xlu0 %2524
        %2526 = vrot.lane.b32.xlu0 %v2274, 113
        %v2527 = vpop.permute.xlu0 %2526
        %2528 = vrot.lane.b32.xlu0 %v2278, 113
        %v2529 = vpop.permute.xlu0 %2528
        %2530 = vrot.lane.b32.xlu0 %v2266, 113
        %v2531 = vpop.permute.xlu0 %2530
        %2532 = vrot.lane.b32.xlu0 %v2270, 113
        %v2533 = vpop.permute.xlu0 %2532
        %2534 = vrot.lane.b32.xlu0 %v2276, 113
        %v2535 = vpop.permute.xlu0 %2534
        %2536 = vrot.lane.b32.xlu0 %v2280, 113
        %v2537 = vpop.permute.xlu0 %2536
        %v2538 = vsel %vm736, %v2523, %v2531
        %v2539 = vsel %vm736, %v2525, %v2533
        %v2540 = vsel %vm736, %v2527, %v2535
        %v2541 = vsel %vm736, %v2529, %v2537
        %v2542 = vsel %vm736, %v2531, %v2523
        %v2543 = vsel %vm736, %v2533, %v2525
        %v2544 = vsel %vm736, %v2535, %v2527
        %v2545 = vsel %vm736, %v2537, %v2529
        %v2546 = vmul.f32 %v742, %v2538
        %v2547 = vmul.f32 %v746, %v2542
        %v2548 = vmul.f32 %v742, %v2539
        %v2549 = vmul.f32 %v746, %v2543
        %v2550 = vmul.f32 %v742, %v2540
        %v2551 = vmul.f32 %v746, %v2544
        %v2552 = vmul.f32 %v742, %v2541
        %v2553 = vmul.f32 %v746, %v2545
        %v2554 = vadd.f32 %v2514, %v2546
        %v2555 = vadd.f32 %v2515, %v2547
        %v2556 = vadd.f32 %v2516, %v2548
        %v2557 = vadd.f32 %v2517, %v2549
        %v2558 = vadd.f32 %v2518, %v2550
        %v2559 = vadd.f32 %v2519, %v2551
        %v2560 = vadd.f32 %v2520, %v2552
        %v2561 = vadd.f32 %v2521, %v2553
        %2562 = vrot.lane.b32.xlu0 %v2284, 112
        %v2563 = vpop.permute.xlu0 %2562
        %2564 = vrot.lane.b32.xlu0 %v2288, 112
        %v2565 = vpop.permute.xlu0 %2564
        %2566 = vrot.lane.b32.xlu0 %v2294, 112
        %v2567 = vpop.permute.xlu0 %2566
        %2568 = vrot.lane.b32.xlu0 %v2298, 112
        %v2569 = vpop.permute.xlu0 %2568
        %2570 = vrot.lane.b32.xlu0 %v2286, 112
        %v2571 = vpop.permute.xlu0 %2570
        %2572 = vrot.lane.b32.xlu0 %v2290, 112
        %v2573 = vpop.permute.xlu0 %2572
        %2574 = vrot.lane.b32.xlu0 %v2296, 112
        %v2575 = vpop.permute.xlu0 %2574
        %2576 = vrot.lane.b32.xlu0 %v2300, 112
        %v2577 = vpop.permute.xlu0 %2576
        %v2578 = vsel %vm753, %v2563, %v2571
        %v2579 = vsel %vm753, %v2565, %v2573
        %v2580 = vsel %vm753, %v2567, %v2575
        %v2581 = vsel %vm753, %v2569, %v2577
        %v2582 = vsel %vm753, %v2571, %v2563
        %v2583 = vsel %vm753, %v2573, %v2565
        %v2584 = vsel %vm753, %v2575, %v2567
        %v2585 = vsel %vm753, %v2577, %v2569
        %v2586 = vmul.f32 %v759, %v2578
        %v2587 = vmul.f32 %v763, %v2582
        %v2588 = vmul.f32 %v759, %v2579
        %v2589 = vmul.f32 %v763, %v2583
        %v2590 = vmul.f32 %v759, %v2580
        %v2591 = vmul.f32 %v763, %v2584
        %v2592 = vmul.f32 %v759, %v2581
        %v2593 = vmul.f32 %v763, %v2585
        %v2594 = vadd.f32 %v2554, %v2586
        %v2595 = vadd.f32 %v2555, %v2587
        %v2596 = vadd.f32 %v2556, %v2588
        %v2597 = vadd.f32 %v2557, %v2589
        %v2598 = vadd.f32 %v2558, %v2590
        %v2599 = vadd.f32 %v2559, %v2591
        %v2600 = vadd.f32 %v2560, %v2592
        %v2601 = vadd.f32 %v2561, %v2593
        %2602 = vrot.lane.b32.xlu0 %v2304, 111
        %v2603 = vpop.permute.xlu0 %2602
        %2604 = vrot.lane.b32.xlu0 %v2308, 111
        %v2605 = vpop.permute.xlu0 %2604
        %2606 = vrot.lane.b32.xlu0 %v2314, 111
        %v2607 = vpop.permute.xlu0 %2606
        %2608 = vrot.lane.b32.xlu0 %v2318, 111
        %v2609 = vpop.permute.xlu0 %2608
        %2610 = vrot.lane.b32.xlu0 %v2306, 111
        %v2611 = vpop.permute.xlu0 %2610
        %2612 = vrot.lane.b32.xlu0 %v2310, 111
        %v2613 = vpop.permute.xlu0 %2612
        %2614 = vrot.lane.b32.xlu0 %v2316, 111
        %v2615 = vpop.permute.xlu0 %2614
        %2616 = vrot.lane.b32.xlu0 %v2320, 111
        %v2617 = vpop.permute.xlu0 %2616
        %v2618 = vsel %vm770, %v2603, %v2611
        %v2619 = vsel %vm770, %v2605, %v2613
        %v2620 = vsel %vm770, %v2607, %v2615
        %v2621 = vsel %vm770, %v2609, %v2617
        %v2622 = vsel %vm770, %v2611, %v2603
        %v2623 = vsel %vm770, %v2613, %v2605
        %v2624 = vsel %vm770, %v2615, %v2607
        %v2625 = vsel %vm770, %v2617, %v2609
        %v2626 = vmul.f32 %v776, %v2618
        %v2627 = vmul.f32 %v780, %v2622
        %v2628 = vmul.f32 %v776, %v2619
        %v2629 = vmul.f32 %v780, %v2623
        %v2630 = vmul.f32 %v776, %v2620
        %v2631 = vmul.f32 %v780, %v2624
        %v2632 = vmul.f32 %v776, %v2621
        %v2633 = vmul.f32 %v780, %v2625
        %v2634 = vadd.f32 %v2594, %v2626
        %v2635 = vadd.f32 %v2595, %v2627
        %v2636 = vadd.f32 %v2596, %v2628
        %v2637 = vadd.f32 %v2597, %v2629
        %v2638 = vadd.f32 %v2598, %v2630
        %v2639 = vadd.f32 %v2599, %v2631
        %v2640 = vadd.f32 %v2600, %v2632
        %v2641 = vadd.f32 %v2601, %v2633
        %v2642 = vld [vmem:[%s16] sm:$0xff]
        %v2643 = vld [vmem:[%s16 + $0x8] sm:$0xff]
        %v2644 = vld [vmem:[%s16 + $0x10] sm:$0xff]
        %v2645 = vld [vmem:[%s16 + $0x18] sm:$0xff]
        %2647 = vset.pattern.permute.xlu0 0
        %2648 = vperm.xlu0 %2647, %v2642
        %v2649 = vpop.permute.xlu0 %2648
        %2652 = vset.pattern.permute.xlu0 0
        %2653 = vperm.xlu0 %2652, %v2643
        %v2654 = vpop.permute.xlu0 %2653
        %2657 = vset.pattern.permute.xlu0 0
        %2658 = vperm.xlu0 %2657, %v2644
        %v2659 = vpop.permute.xlu0 %2658
        %2662 = vset.pattern.permute.xlu0 0
        %2663 = vperm.xlu0 %2662, %v2645
        %v2664 = vpop.permute.xlu0 %2663
        %v2666 = vadd.f32 %v2634, %v2649
        %v2667 = vadd.f32 %v2635, %v2649
        %v2668 = vadd.f32 %v2636, %v2654
        %v2669 = vadd.f32 %v2637, %v2654
        %v2670 = vadd.f32 %v2638, %v2659
        %v2671 = vadd.f32 %v2639, %v2659
        %v2672 = vadd.f32 %v2640, %v2664
        %v2673 = vadd.f32 %v2641, %v2664
        %v2674 = vmax.f32 %v2666, 0.0
        %v2675 = vmax.f32 %v2667, 0.0
        %v2676 = vmax.f32 %v2668, 0.0
        %v2677 = vmax.f32 %v2669, 0.0
        %v2678 = vmax.f32 %v2670, 0.0
        %v2679 = vmax.f32 %v2671, 0.0
        %v2680 = vmax.f32 %v2672, 0.0
        %v2681 = vmax.f32 %v2673, 0.0
        %2682 = vst [vmem:[%s636] sm:$0xff] %v2674
        %2683 = vst [vmem:[%s636 + $0x8] sm:$0xff] %v2675
        %2684 = vst [vmem:[%s636 + $0x10] sm:$0xff] %v2676
        %2685 = vst [vmem:[%s636 + $0x18] sm:$0xff] %v2677
        %2686 = vst [vmem:[%s636 + $0x20] sm:$0xff] %v2678
        %2687 = vst [vmem:[%s636 + $0x28] sm:$0xff] %v2679
        %2688 = vst [vmem:[%s636 + $0x30] sm:$0xff] %v2680
        %2689 = vst [vmem:[%s636 + $0x38] sm:$0xff] %v2681
        %p2690 = scmp.lt.s32.totalorder %s38, 1
        %s2691 = scalar_select %p2690, %s38, 1
        %s2692 = smul.addr %s2691, 8
        %s2693 = smul.addr %s2692, 8
        %s2694 = scalar_lea.vmem %s17, %s2693
        // Predicated region
        $region109: #{_lambda_.1} parent=83 // pred_check
          %p2695 = pneg %p402
        $region110: #{_lambda_.1} parent=83 // pred_check_branch
          %2697 = sbr.rel (%p2695) target = $region112
        $region111: #{_lambda_.1} parent=83 // pred_region
          _
        $region112: #{_lambda_.1} parent=83 // pred_fallthru
          _
      $region84: #{_lambda_.1} parent=5 // pred_fallthru
        _
      %p2698 = scmp.le.s32.totalorder 2, %s33
      // Predicated region
      $region113: #{_lambda_.1} parent=5 // pred_check
        %p2699 = pneg %p2698
      $region114: #{_lambda_.1} parent=5 // pred_check_branch
        %2701 = sbr.rel (%p2699) target = $region116
      $region115: #{_lambda_.1} parent=5 // pred_region
        %s2702 = ssub.s32 %s33, 2
        // Predicated region
        $region117: #{_lambda_.1} parent=115 // pred_check
          %p2703 = pneg %p408
        $region118: #{_lambda_.1} parent=115 // pred_check_branch
          %2705 = sbr.rel (%p2703) target = $region120
        $region119: #{_lambda_.1} parent=115 // pred_region
          %p2706 = scmp.lt.s32.totalorder %s39, 1
          %s2707 = scalar_select %p2706, %s39, 1
          %s2708 = smul.addr %s2707, 8
          %s2709 = smul.addr %s2708, 8
          %s2710 = scalar_lea.vmem %s17, %s2709
        $region120: #{_lambda_.1} parent=115 // pred_fallthru
          _
      $region116: #{_lambda_.1} parent=5 // pred_fallthru
        _
    $region6: #{_lambda_.1} parent=1 // loop_footer
      %s37 = sadd.s32 1, %s33
    $region7: #{_lambda_.1} parent=1 // loop_footer_branch
      %32 = sbr.rel target = $region3
    $region8: #{_lambda_.1} parent=1 // loop_exit
      _
    %2711 = vsyncpa [#allocation5], 1
    %s2712 = scalar_lea.sflag [#allocation5], 1
    %2713 = vsyncpa %s2712, 1
    %2714 = vsyncpa [#allocation7], 1
    %2715 = vsyncpa [#allocation10], 1
    %2716 = vsyncpa [#allocation13], 1

</llo_original>
